<compile_context>
chip_gen: v7x
topology: tpu7x:2x2x1
jax: 0.10.0
libtpu: 0.0.40
codegen_flags: <defaults>
</compile_context>

<pallas_src>
import functools

import jax
import jax.numpy as jnp
from jax import lax
from jax.experimental import pallas as pl
from jax.experimental.pallas import tpu as pltpu

LANE = 128
OUT_ROWS = 8          # sublane-dense output rows (batch padded to 8)


def _ru(n, m=LANE):
    """Round n up to a multiple of m."""
    return ((n + m - 1) // m) * m


def _pad2(x, rows=None, cols=None):
    r = x.shape[0] if rows is None else rows
    c = x.shape[1] if cols is None else cols
    return jnp.pad(x, ((0, r - x.shape[0]), (0, c - x.shape[1])))


# ----------------------------------------------------------------------------
# Fused kernel (branch 0 = recipe, branch 1 = image)
# ----------------------------------------------------------------------------
def _segment_sum_rows(x, batch, group, rows):
    """Per-batch sum over `group` consecutive rows of x:(batch*group, d) f32,
    scattered into a (rows, d) f32 slab (rows >= batch stay zero).
    Pure VPU/XLU: sublane reduction + iota-mask select; no pooling-matrix
    matmul, no sub-tile concatenates."""
    d = x.shape[1]
    row_id = lax.broadcasted_iota(jnp.int32, (rows, d), 0)
    acc = jnp.zeros((rows, d), jnp.float32)
    for b in range(batch):                      # batch is tiny & static
        s = jnp.sum(x[b * group:(b + 1) * group], axis=0, keepdims=True)
        acc = acc + jnp.where(row_id == b, s, 0.0)
    return acc


def _proj_head(x_f32, w_ref, b_ref):
    """F.normalize(tanh(Linear(x))) with f32 epilogue.
    rsqrt(max(sumsq, eps^2)) == 1 / max(||y||, 1e-12)."""
    y = jnp.dot(x_f32.astype(jnp.bfloat16), w_ref[...],
                preferred_element_type=jnp.float32) + b_ref[...]
    y = jnp.tanh(y)
    sumsq = jnp.sum(y * y, axis=-1, keepdims=True)
    inv = lax.rsqrt(jnp.maximum(sumsq, 1e-24))
    return y * inv


def _tfood_fused_kernel(tok_ref, lw_ref, lb_ref, prw_ref, prb_ref,
                        patch_ref, pw_ref, pb_ref, cls_ref, ew_ref, eb_ref,
                        piw_ref, pib_ref, o_ref,
                        *, num_layers, batch, seq, num_patches):
    branch = pl.program_id(0)

    # ---- branch 0 : recipe -------------------------------------------------
    #   h = tok; for l: h = tanh(h @ W_l + b_l)
    #   pooled = mean_over_seq(h); o = F.normalize(tanh(pooled @ Wp + bp))
    @pl.when(branch == 0)
    def _recipe():
        def layer(l, h):
            y = jnp.dot(h.astype(jnp.bfloat16), lw_ref[l],
                        preferred_element_type=jnp.float32) + lb_ref[l]
            return jnp.tanh(y)                       # carry stays f32
        h = lax.fori_loop(0, num_layers, layer,
                          tok_ref[...].astype(jnp.float32), unroll=True)
        pooled = _segment_sum_rows(h, batch, seq, OUT_ROWS) * (1.0 / seq)
        o_ref[...] = _proj_head(pooled, prw_ref, prb_ref).astype(o_ref.dtype)

    # ---- branch 1 : image --------------------------------------------------
    #   pe      = patches @ Wp + bp
    #   mean_b  = (cls + sum_b(pe)) / (1 + num_patches)
    #   cls_out = tanh((cls + mean_b) @ We + be)      (only CLS row needed)
    #   o       = F.normalize(tanh(cls_out @ Wh + bh))
    @pl.when(branch == 1)
    def _image():
        pe = jnp.dot(patch_ref[...], pw_ref[...],
                     preferred_element_type=jnp.float32) + pb_ref[...]
        sum_b = _segment_sum_rows(pe, batch, num_patches, OUT_ROWS)   # f32
        cls = cls_ref[...]                                            # (1,Vp)
        mean_b = (cls + sum_b) * (1.0 / (1 + num_patches))
        mixed_cls = cls + mean_b                     # rows >= batch discarded
        cls_out = jnp.tanh(
            jnp.dot(mixed_cls.astype(jnp.bfloat16), ew_ref[...],
                    preferred_element_type=jnp.float32) + eb_ref[...])
        o_ref[...] = _proj_head(cls_out, piw_ref, pib_ref).astype(o_ref.dtype)


def _resident_spec(arr):
    """Full-array VMEM block with a constant index map (resident across the
    2-point branch grid)."""
    zero = (0,) * arr.ndim
    return pl.BlockSpec(arr.shape, lambda b, _z=zero: _z)


def tfood_fused(tok, lw, lb, prw, prb, patches, pw, pb, cls, ew, eb, piw, pib,
                *, batch, seq, num_patches, ep):
    num_layers = lw.shape[0]
    m_r, hp = tok.shape
    m_i, pdp = patches.shape
    vp = pw.shape[1]
    flops = (2 * m_r * hp * hp * num_layers + 2 * OUT_ROWS * hp * ep
             + 2 * m_i * pdp * vp + 2 * OUT_ROWS * vp * vp
             + 2 * OUT_ROWS * vp * ep)
    trans = num_layers * m_r * hp + OUT_ROWS * vp + 2 * OUT_ROWS * ep
    operands = (tok, lw, lb, prw, prb, patches, pw, pb, cls, ew, eb, piw, pib)
    bytes_acc = (sum(a.size * a.dtype.itemsize for a in operands)
                 + 2 * OUT_ROWS * ep * 4)
    return pl.pallas_call(
        functools.partial(_tfood_fused_kernel, num_layers=num_layers,
                          batch=batch, seq=seq, num_patches=num_patches),
        grid=(2,),
        in_specs=[_resident_spec(a) for a in operands],
        out_specs=pl.BlockSpec((None, OUT_ROWS, ep), lambda b: (b, 0, 0)),
        out_shape=jax.ShapeDtypeStruct((2, OUT_ROWS, ep), jnp.float32),
        compiler_params=pltpu.CompilerParams(
            dimension_semantics=("parallel",)),
        cost_estimate=pl.CostEstimate(flops=flops, transcendentals=trans,
                                      bytes_accessed=bytes_acc),
    )(*operands)


# ----------------------------------------------------------------------------
# Parameter construction (deterministic, synthetic) + one-time packing
# ----------------------------------------------------------------------------
def init_params(vocab_size, dim_emb, hidden_size, num_layers, vision_width,
                patch_dim, seed=1234):
    keys = iter(jax.random.split(jax.random.PRNGKey(seed), 32))

    def dense(k, shape, scale=0.02):
        return jax.random.normal(k, shape, jnp.float32) * scale

    params = {}
    # TODO(synk): real HTransformerRecipeEmbedding source not provided; using
    # embedding lookup + per-layer dense(tanh) + mean-pool as a stand-in.
    params["recipe_emb_table"] = dense(next(keys), (vocab_size, hidden_size))
    params["recipe_layers"] = [
        (dense(next(keys), (hidden_size, hidden_size)),
         dense(next(keys), (hidden_size,)))
        for _ in range(num_layers)
    ]
    # TODO(synk): real TFoodImageEncoder (ViT) source not provided; using patch
    # embedding + CLS token + one global-mixing dense layer as a stand-in.
    params["patch_w"] = dense(next(keys), (patch_dim, vision_width))
    params["patch_b"] = dense(next(keys), (vision_width,))
    params["cls_token"] = dense(next(keys), (1, 1, vision_width))
    params["enc_w"] = dense(next(keys), (vision_width, vision_width))
    params["enc_b"] = dense(next(keys), (vision_width,))
    # --- visible TFood heads ---
    params["proj_recipe_w"] = dense(next(keys), (hidden_size, dim_emb))
    params["proj_recipe_b"] = dense(next(keys), (dim_emb,))
    params["proj_image_w"] = dense(next(keys), (vision_width, dim_emb))
    params["proj_image_b"] = dense(next(keys), (dim_emb,))
    return params


def pack_params(params):
    """One-time packing: pad every feature axis to a 128-lane multiple (zero
    padding is mathematically inert) and cast MXU operands to bf16; biases
    and the CLS token (f32-add only) intentionally stay f32."""
    h = params["recipe_emb_table"].shape[1]
    e = params["proj_recipe_w"].shape[1]
    v = params["patch_w"].shape[1]
    pd = params["patch_w"].shape[0]
    hp, ep, vp, pdp = _ru(h), _ru(e), _ru(v), _ru(pd)

    packed = {}
    packed["recipe_emb_table"] = _pad2(params["recipe_emb_table"],
                                       cols=hp).astype(jnp.bfloat16)
    packed["recipe_layers_w"] = jnp.stack(
        [_pad2(w, hp, hp) for w, _ in params["recipe_layers"]]
    ).astype(jnp.bfloat16)                                       # (L, Hp, Hp)
    packed["recipe_layers_b"] = jnp.stack(
        [jnp.pad(b, (0, hp - h)).reshape(1, hp)
         for _, b in params["recipe_layers"]]).astype(jnp.float32)  # (L,1,Hp)
    packed["proj_recipe_w"] = _pad2(params["proj_recipe_w"], hp,
                                    ep).astype(jnp.bfloat16)
    packed["proj_recipe_b"] = jnp.pad(params["proj_recipe_b"],
                                      (0, ep - e)).reshape(1, ep)
    packed["patch_w"] = _pad2(params["patch_w"], pdp, vp).astype(jnp.bfloat16)
    packed["patch_b"] = jnp.pad(params["patch_b"], (0, vp - v)).reshape(1, vp)
    packed["cls_token"] = jnp.pad(params["cls_token"].reshape(1, v),
                                  ((0, 0), (0, vp - v)))            # f32
    packed["enc_w"] = _pad2(params["enc_w"], vp, vp).astype(jnp.bfloat16)
    packed["enc_b"] = jnp.pad(params["enc_b"], (0, vp - v)).reshape(1, vp)
    packed["proj_image_w"] = _pad2(params["proj_image_w"], vp,
                                   ep).astype(jnp.bfloat16)
    packed["proj_image_b"] = jnp.pad(params["proj_image_b"],
                                     (0, ep - e)).reshape(1, ep)
    return packed


# ----------------------------------------------------------------------------
# Forward pass
# ----------------------------------------------------------------------------
def tfood_forward(packed, recipe, img, *, patch_size, dim_emb):
    hp = packed["recipe_layers_w"].shape[1]
    ep = packed["proj_recipe_w"].shape[1]
    pdp = packed["patch_w"].shape[0]

    # ---- recipe tokens (XLA glue) ----
    b, s = recipe.shape
    assert b <= OUT_ROWS
    # TODO(synk): fold this gather into the kernel input path at real sizes.
    tok = packed["recipe_emb_table"][recipe].reshape(b * s, hp)

    # ---- image patches (XLA glue) ----
    bi, c, hi, wi = img.shape
    p = patch_size
    npatch = (hi // p) * (wi // p)
    pd = c * p * p
    # TODO(synk): express this NCHW->patch relayout as a strided DMA at real
    # image sizes instead of an XLA transpose pass.
    patches = img.reshape(bi, c, hi // p, p, wi // p, p)
    patches = patches.transpose(0, 2, 4, 1, 3, 5).reshape(bi * npatch, pd)
    patches = jnp.pad(patches, ((0, 0), (0, pdp - pd))).astype(jnp.bfloat16)

    out = tfood_fused(
        tok, packed["recipe_layers_w"], packed["recipe_layers_b"],
        packed["proj_recipe_w"], packed["proj_recipe_b"],
        patches, packed["patch_w"], packed["patch_b"], packed["cls_token"],
        packed["enc_w"], packed["enc_b"],
        packed["proj_image_w"], packed["proj_image_b"],
        batch=b, seq=s, num_patches=npatch, ep=ep)

    # slice away sublane/lane padding (padded lanes never touched the L2 norm)
    return {
        "recipe_embedding": out[0, :b, :dim_emb],
        "image_embedding": out[1, :bi, :dim_emb],
    }


# ----------------------------------------------------------------------------
if __name__ == "__main__":
    # small shapes consistent with the module
    vocab_size, dim_emb, hidden_size = 50, 32, 32
    num_heads, num_layers, vision_width = 4, 2, 48
    B, S = 2, 8
    C, Himg, Wimg, patch_size = 3, 16, 16, 8
    patch_dim = C * patch_size * patch_size

    key = jax.random.PRNGKey(0)
    k_rec, k_img = jax.random.split(key)
    recipe = jax.random.randint(k_rec, (B, S), 0, vocab_size)        # token ids
    img = jax.random.normal(k_img, (B, C, Himg, Wimg), jnp.float32)  # NCHW

    params = init_params(vocab_size, dim_emb, hidden_size, num_layers,
                         vision_width, patch_dim)
    packed = pack_params(params)

    fwd = jax.jit(functools.partial(tfood_forward, patch_size=patch_size,
                                    dim_emb=dim_emb))
    out = fwd(packed, recipe, img)
    jax.block_until_ready(out)

    assert out["recipe_embedding"].shape == (B, dim_emb)
    assert out["image_embedding"].shape == (B, dim_emb)
    assert bool(jnp.all(jnp.isfinite(out["recipe_embedding"])))
    assert bool(jnp.all(jnp.isfinite(out["image_embedding"])))
    print("KERNEL_OK")
</pallas_src>

<mosaic_0001>
module attributes {stable_mosaic.version = 11 : i64} {
  func.func @_tfood_fused_kernel(%arg0: i32, %arg1: memref<16x128xbf16, #tpu.memory_space<vmem>>, %arg2: memref<2x128x128xbf16, #tpu.memory_space<vmem>>, %arg3: memref<2x1x128xf32, #tpu.memory_space<vmem>>, %arg4: memref<128x128xbf16, #tpu.memory_space<vmem>>, %arg5: memref<1x128xf32, #tpu.memory_space<vmem>>, %arg6: memref<8x256xbf16, #tpu.memory_space<vmem>>, %arg7: memref<256x128xbf16, #tpu.memory_space<vmem>>, %arg8: memref<1x128xf32, #tpu.memory_space<vmem>>, %arg9: memref<1x128xf32, #tpu.memory_space<vmem>>, %arg10: memref<128x128xbf16, #tpu.memory_space<vmem>>, %arg11: memref<1x128xf32, #tpu.memory_space<vmem>>, %arg12: memref<128x128xbf16, #tpu.memory_space<vmem>>, %arg13: memref<1x128xf32, #tpu.memory_space<vmem>>, %arg14: memref<1x8x128xf32, #tpu.memory_space<vmem>>) attributes {dimension_semantics = [#tpu.dimension_semantics<parallel>], iteration_bounds = array<i64: 2>, scalar_prefetch = 0 : i64, scratch_operands = 0 : i64, tpu.core_type = #tpu.core_type<tc>, window_params = [{pipeline_mode = #tpu.pipeline_mode<synchronous>, transform_indices = @transform_0, window_bounds = array<i64: 16, 128>}, {pipeline_mode = #tpu.pipeline_mode<synchronous>, transform_indices = @transform_1, window_bounds = array<i64: 2, 128, 128>}, {pipeline_mode = #tpu.pipeline_mode<synchronous>, transform_indices = @transform_2, window_bounds = array<i64: 2, 1, 128>}, {pipeline_mode = #tpu.pipeline_mode<synchronous>, transform_indices = @transform_3, window_bounds = array<i64: 128, 128>}, {pipeline_mode = #tpu.pipeline_mode<synchronous>, transform_indices = @transform_4, window_bounds = array<i64: 1, 128>}, {pipeline_mode = #tpu.pipeline_mode<synchronous>, transform_indices = @transform_5, window_bounds = array<i64: 8, 256>}, {pipeline_mode = #tpu.pipeline_mode<synchronous>, transform_indices = @transform_6, window_bounds = array<i64: 256, 128>}, {pipeline_mode = #tpu.pipeline_mode<synchronous>, transform_indices = @transform_7, window_bounds = array<i64: 1, 128>}, {pipeline_mode = #tpu.pipeline_mode<synchronous>, transform_indices = @transform_8, window_bounds = array<i64: 1, 128>}, {pipeline_mode = #tpu.pipeline_mode<synchronous>, transform_indices = @transform_9, window_bounds = array<i64: 128, 128>}, {pipeline_mode = #tpu.pipeline_mode<synchronous>, transform_indices = @transform_10, window_bounds = array<i64: 1, 128>}, {pipeline_mode = #tpu.pipeline_mode<synchronous>, transform_indices = @transform_11, window_bounds = array<i64: 128, 128>}, {pipeline_mode = #tpu.pipeline_mode<synchronous>, transform_indices = @transform_12, window_bounds = array<i64: 1, 128>}, {transform_indices = @transform_13, window_bounds = array<i64: 1, 8, 128>}]} {
    %c0_i32 = arith.constant 0 : i32
    %0 = arith.cmpi eq, %arg0, %c0_i32 : i32
    %1 = arith.extui %0 : i1 to i32
    %c0_i32_0 = arith.constant 0 : i32
    %2 = arith.cmpi ne, %1, %c0_i32_0 : i32
    scf.if %2 {
      %c0 = arith.constant 0 : index
      %c0_2 = arith.constant 0 : index
      %6 = vector.load %arg1[%c0, %c0_2] : memref<16x128xbf16, #tpu.memory_space<vmem>>, vector<16x128xbf16>
      %7 = arith.extf %6 : vector<16x128xbf16> to vector<16x128xf32>
      %c0_i32_3 = arith.constant 0 : i32
      %8 = arith.truncf %7 : vector<16x128xf32> to vector<16x128xbf16>
      %9 = arith.index_cast %c0_i32_3 : i32 to index
      %c0_4 = arith.constant 0 : index
      %c0_5 = arith.constant 0 : index
      %10 = vector.load %arg2[%9, %c0_4, %c0_5] : memref<2x128x128xbf16, #tpu.memory_space<vmem>>, vector<1x128x128xbf16>
      %11 = vector.shape_cast %10 : vector<1x128x128xbf16> to vector<128x128xbf16>
      %cst = arith.constant dense<0.000000e+00> : vector<16x128xf32>
      %12 = tpu.matmul %8, %11, %cst {dimension_numbers = #tpu.dot_dimension_numbers<[1], [0], [0], [1], [0, 0, 1, 1], [], []>} : vector<16x128xbf16>, vector<128x128xbf16>, vector<16x128xf32> -> vector<16x128xf32>
      %13 = arith.index_cast %c0_i32_3 : i32 to index
      %c0_6 = arith.constant 0 : index
      %c0_7 = arith.constant 0 : index
      %14 = vector.load %arg3[%13, %c0_6, %c0_7] : memref<2x1x128xf32, #tpu.memory_space<vmem>>, vector<1x1x128xf32>
      %15 = vector.shape_cast %14 : vector<1x1x128xf32> to vector<1x128xf32>
      %16 = vector.broadcast %15 : vector<1x128xf32> to vector<16x128xf32>
      %17 = arith.addf %12, %16 : vector<16x128xf32>
      %18 = math.tanh %17 : vector<16x128xf32>
      %c1_i32_8 = arith.constant 1 : i32
      %19 = arith.truncf %18 : vector<16x128xf32> to vector<16x128xbf16>
      %20 = arith.index_cast %c1_i32_8 : i32 to index
      %c0_9 = arith.constant 0 : index
      %c0_10 = arith.constant 0 : index
      %21 = vector.load %arg2[%20, %c0_9, %c0_10] : memref<2x128x128xbf16, #tpu.memory_space<vmem>>, vector<1x128x128xbf16>
      %22 = vector.shape_cast %21 : vector<1x128x128xbf16> to vector<128x128xbf16>
      %cst_11 = arith.constant dense<0.000000e+00> : vector<16x128xf32>
      %23 = tpu.matmul %19, %22, %cst_11 {dimension_numbers = #tpu.dot_dimension_numbers<[1], [0], [0], [1], [0, 0, 1, 1], [], []>} : vector<16x128xbf16>, vector<128x128xbf16>, vector<16x128xf32> -> vector<16x128xf32>
      %24 = arith.index_cast %c1_i32_8 : i32 to index
      %c0_12 = arith.constant 0 : index
      %c0_13 = arith.constant 0 : index
      %25 = vector.load %arg3[%24, %c0_12, %c0_13] : memref<2x1x128xf32, #tpu.memory_space<vmem>>, vector<1x1x128xf32>
      %26 = vector.shape_cast %25 : vector<1x1x128xf32> to vector<1x128xf32>
      %27 = vector.broadcast %26 : vector<1x128xf32> to vector<16x128xf32>
      %28 = arith.addf %23, %27 : vector<16x128xf32>
      %29 = math.tanh %28 : vector<16x128xf32>
      %c2_i32 = arith.constant 2 : i32
      %30 = tpu.iota {dimensions = array<i32: 0>} : vector<8x128xi32>
      %cst_14 = arith.constant 0.000000e+00 : f32
      %31 = vector.broadcast %cst_14 : f32 to vector<8x128xf32>
      %32 = vector.extract_strided_slice %29 {offsets = [0, 0], sizes = [8, 128], strides = [1, 1]} : vector<16x128xf32> to vector<8x128xf32>
      %cst_15 = arith.constant dense<0.000000e+00> : vector<128xf32>
      %33 = vector.multi_reduction <add>, %32, %cst_15 [0] : vector<8x128xf32> to vector<128xf32>
      %34 = vector.shape_cast %33 : vector<128xf32> to vector<1x128xf32>
      %c0_i32_16 = arith.constant 0 : i32
      %35 = vector.broadcast %c0_i32_16 : i32 to vector<8x128xi32>
      %36 = arith.cmpi eq, %30, %35 : vector<8x128xi32>
      %cst_17 = arith.constant 0.000000e+00 : f32
      %37 = vector.shape_cast %34 : vector<1x128xf32> to vector<1x128xf32>
      %38 = vector.broadcast %37 : vector<1x128xf32> to vector<8x128xf32>
      %39 = vector.broadcast %cst_17 : f32 to vector<8x128xf32>
      %40 = arith.select %36, %38, %39 : vector<8x128xi1>, vector<8x128xf32>
      %41 = arith.addf %31, %40 : vector<8x128xf32>
      %42 = vector.extract_strided_slice %29 {offsets = [8, 0], sizes = [8, 128], strides = [1, 1]} : vector<16x128xf32> to vector<8x128xf32>
      %cst_18 = arith.constant dense<0.000000e+00> : vector<128xf32>
      %43 = vector.multi_reduction <add>, %42, %cst_18 [0] : vector<8x128xf32> to vector<128xf32>
      %44 = vector.shape_cast %43 : vector<128xf32> to vector<1x128xf32>
      %c1_i32_19 = arith.constant 1 : i32
      %45 = vector.broadcast %c1_i32_19 : i32 to vector<8x128xi32>
      %46 = arith.cmpi eq, %30, %45 : vector<8x128xi32>
      %cst_20 = arith.constant 0.000000e+00 : f32
      %47 = vector.shape_cast %44 : vector<1x128xf32> to vector<1x128xf32>
      %48 = vector.broadcast %47 : vector<1x128xf32> to vector<8x128xf32>
      %49 = vector.broadcast %cst_20 : f32 to vector<8x128xf32>
      %50 = arith.select %46, %48, %49 : vector<8x128xi1>, vector<8x128xf32>
      %51 = arith.addf %41, %50 : vector<8x128xf32>
      %cst_21 = arith.constant 1.250000e-01 : f32
      %52 = vector.broadcast %cst_21 : f32 to vector<8x128xf32>
      %53 = arith.mulf %51, %52 : vector<8x128xf32>
      %54 = arith.truncf %53 : vector<8x128xf32> to vector<8x128xbf16>
      %c0_22 = arith.constant 0 : index
      %c0_23 = arith.constant 0 : index
      %55 = vector.load %arg4[%c0_22, %c0_23] : memref<128x128xbf16, #tpu.memory_space<vmem>>, vector<128x128xbf16>
      %cst_24 = arith.constant dense<0.000000e+00> : vector<8x128xf32>
      %56 = tpu.matmul %54, %55, %cst_24 {dimension_numbers = #tpu.dot_dimension_numbers<[1], [0], [0], [1], [0, 0, 1, 1], [], []>} : vector<8x128xbf16>, vector<128x128xbf16>, vector<8x128xf32> -> vector<8x128xf32>
      %c0_25 = arith.constant 0 : index
      %c0_26 = arith.constant 0 : index
      %57 = vector.load %arg5[%c0_25, %c0_26] : memref<1x128xf32, #tpu.memory_space<vmem>>, vector<1x128xf32>
      %58 = vector.broadcast %57 : vector<1x128xf32> to vector<8x128xf32>
      %59 = arith.addf %56, %58 : vector<8x128xf32>
      %60 = math.tanh %59 : vector<8x128xf32>
      %61 = arith.mulf %60, %60 : vector<8x128xf32>
      %cst_27 = arith.constant dense<0.000000e+00> : vector<8xf32>
      %62 = vector.multi_reduction <add>, %61, %cst_27 [1] : vector<8x128xf32> to vector<8xf32>
      %63 = vector.shape_cast %62 : vector<8xf32> to vector<8x1xf32>
      %cst_28 = arith.constant 1.000000e-24 : f32
      %64 = vector.broadcast %cst_28 : f32 to vector<8x1xf32>
      %65 = arith.maximumf %63, %64 : vector<8x1xf32>
      %66 = math.rsqrt %65 : vector<8x1xf32>
      %67 = vector.broadcast %66 : vector<8x1xf32> to vector<8x128xf32>
      %68 = arith.mulf %60, %67 : vector<8x128xf32>
      %c0_29 = arith.constant 0 : index
      %c0_30 = arith.constant 0 : index
      %c0_31 = arith.constant 0 : index
      %69 = vector.load %arg14[%c0_29, %c0_30, %c0_31] : memref<1x8x128xf32, #tpu.memory_space<vmem>>, vector<1x8x128xf32>
      %70 = vector.shape_cast %69 : vector<1x8x128xf32> to vector<8x128xf32>
      %71 = vector.shape_cast %68 : vector<8x128xf32> to vector<1x8x128xf32>
      tpu.vector_store %arg14[%c0_29, %c0_30, %c0_31], %71 {strides = array<i32>} : memref<1x8x128xf32, #tpu.memory_space<vmem>>, vector<1x8x128xf32>,
    } else {
    }
    %c1_i32 = arith.constant 1 : i32
    %3 = arith.cmpi eq, %arg0, %c1_i32 : i32
    %4 = arith.extui %3 : i1 to i32
    %c0_i32_1 = arith.constant 0 : i32
    %5 = arith.cmpi ne, %4, %c0_i32_1 : i32
    scf.if %5 {
      %c0 = arith.constant 0 : index
      %c0_2 = arith.constant 0 : index
      %6 = vector.load %arg6[%c0, %c0_2] : memref<8x256xbf16, #tpu.memory_space<vmem>>, vector<8x256xbf16>
      %c0_3 = arith.constant 0 : index
      %c0_4 = arith.constant 0 : index
      %7 = vector.load %arg7[%c0_3, %c0_4] : memref<256x128xbf16, #tpu.memory_space<vmem>>, vector<256x128xbf16>
      %cst = arith.constant dense<0.000000e+00> : vector<8x128xf32>
      %8 = tpu.matmul %6, %7, %cst {dimension_numbers = #tpu.dot_dimension_numbers<[1], [0], [0], [1], [0, 0, 1, 1], [], []>} : vector<8x256xbf16>, vector<256x128xbf16>, vector<8x128xf32> -> vector<8x128xf32>
      %c0_5 = arith.constant 0 : index
      %c0_6 = arith.constant 0 : index
      %9 = vector.load %arg8[%c0_5, %c0_6] : memref<1x128xf32, #tpu.memory_space<vmem>>, vector<1x128xf32>
      %10 = vector.broadcast %9 : vector<1x128xf32> to vector<8x128xf32>
      %11 = arith.addf %8, %10 : vector<8x128xf32>
      %12 = tpu.iota {dimensions = array<i32: 0>} : vector<8x128xi32>
      %cst_7 = arith.constant 0.000000e+00 : f32
      %13 = vector.broadcast %cst_7 : f32 to vector<8x128xf32>
      %14 = vector.extract_strided_slice %11 {offsets = [0, 0], sizes = [4, 128], strides = [1, 1]} : vector<8x128xf32> to vector<4x128xf32>
      %cst_8 = arith.constant dense<0.000000e+00> : vector<128xf32>
      %15 = vector.multi_reduction <add>, %14, %cst_8 [0] : vector<4x128xf32> to vector<128xf32>
      %16 = vector.shape_cast %15 : vector<128xf32> to vector<1x128xf32>
      %c0_i32_9 = arith.constant 0 : i32
      %17 = vector.broadcast %c0_i32_9 : i32 to vector<8x128xi32>
      %18 = arith.cmpi eq, %12, %17 : vector<8x128xi32>
      %cst_10 = arith.constant 0.000000e+00 : f32
      %19 = vector.shape_cast %16 : vector<1x128xf32> to vector<1x128xf32>
      %20 = vector.broadcast %19 : vector<1x128xf32> to vector<8x128xf32>
      %21 = vector.broadcast %cst_10 : f32 to vector<8x128xf32>
      %22 = arith.select %18, %20, %21 : vector<8x128xi1>, vector<8x128xf32>
      %23 = arith.addf %13, %22 : vector<8x128xf32>
      %24 = vector.extract_strided_slice %11 {offsets = [4, 0], sizes = [4, 128], strides = [1, 1]} : vector<8x128xf32> to vector<4x128xf32>
      %cst_11 = arith.constant dense<0.000000e+00> : vector<128xf32>
      %25 = vector.multi_reduction <add>, %24, %cst_11 [0] : vector<4x128xf32> to vector<128xf32>
      %26 = vector.shape_cast %25 : vector<128xf32> to vector<1x128xf32>
      %c1_i32_12 = arith.constant 1 : i32
      %27 = vector.broadcast %c1_i32_12 : i32 to vector<8x128xi32>
      %28 = arith.cmpi eq, %12, %27 : vector<8x128xi32>
      %cst_13 = arith.constant 0.000000e+00 : f32
      %29 = vector.shape_cast %26 : vector<1x128xf32> to vector<1x128xf32>
      %30 = vector.broadcast %29 : vector<1x128xf32> to vector<8x128xf32>
      %31 = vector.broadcast %cst_13 : f32 to vector<8x128xf32>
      %32 = arith.select %28, %30, %31 : vector<8x128xi1>, vector<8x128xf32>
      %33 = arith.addf %23, %32 : vector<8x128xf32>
      %c0_14 = arith.constant 0 : index
      %c0_15 = arith.constant 0 : index
      %34 = vector.load %arg9[%c0_14, %c0_15] : memref<1x128xf32, #tpu.memory_space<vmem>>, vector<1x128xf32>
      %35 = vector.broadcast %34 : vector<1x128xf32> to vector<8x128xf32>
      %36 = arith.addf %35, %33 : vector<8x128xf32>
      %cst_16 = arith.constant 2.000000e-01 : f32
      %37 = vector.broadcast %cst_16 : f32 to vector<8x128xf32>
      %38 = arith.mulf %36, %37 : vector<8x128xf32>
      %39 = vector.broadcast %34 : vector<1x128xf32> to vector<8x128xf32>
      %40 = arith.addf %39, %38 : vector<8x128xf32>
      %41 = arith.truncf %40 : vector<8x128xf32> to vector<8x128xbf16>
      %c0_17 = arith.constant 0 : index
      %c0_18 = arith.constant 0 : index
      %42 = vector.load %arg10[%c0_17, %c0_18] : memref<128x128xbf16, #tpu.memory_space<vmem>>, vector<128x128xbf16>
      %cst_19 = arith.constant dense<0.000000e+00> : vector<8x128xf32>
      %43 = tpu.matmul %41, %42, %cst_19 {dimension_numbers = #tpu.dot_dimension_numbers<[1], [0], [0], [1], [0, 0, 1, 1], [], []>} : vector<8x128xbf16>, vector<128x128xbf16>, vector<8x128xf32> -> vector<8x128xf32>
      %c0_20 = arith.constant 0 : index
      %c0_21 = arith.constant 0 : index
      %44 = vector.load %arg11[%c0_20, %c0_21] : memref<1x128xf32, #tpu.memory_space<vmem>>, vector<1x128xf32>
      %45 = vector.broadcast %44 : vector<1x128xf32> to vector<8x128xf32>
      %46 = arith.addf %43, %45 : vector<8x128xf32>
      %47 = math.tanh %46 : vector<8x128xf32>
      %48 = arith.truncf %47 : vector<8x128xf32> to vector<8x128xbf16>
      %c0_22 = arith.constant 0 : index
      %c0_23 = arith.constant 0 : index
      %49 = vector.load %arg12[%c0_22, %c0_23] : memref<128x128xbf16, #tpu.memory_space<vmem>>, vector<128x128xbf16>
      %cst_24 = arith.constant dense<0.000000e+00> : vector<8x128xf32>
      %50 = tpu.matmul %48, %49, %cst_24 {dimension_numbers = #tpu.dot_dimension_numbers<[1], [0], [0], [1], [0, 0, 1, 1], [], []>} : vector<8x128xbf16>, vector<128x128xbf16>, vector<8x128xf32> -> vector<8x128xf32>
      %c0_25 = arith.constant 0 : index
      %c0_26 = arith.constant 0 : index
      %51 = vector.load %arg13[%c0_25, %c0_26] : memref<1x128xf32, #tpu.memory_space<vmem>>, vector<1x128xf32>
      %52 = vector.broadcast %51 : vector<1x128xf32> to vector<8x128xf32>
      %53 = arith.addf %50, %52 : vector<8x128xf32>
      %54 = math.tanh %53 : vector<8x128xf32>
      %55 = arith.mulf %54, %54 : vector<8x128xf32>
      %cst_27 = arith.constant dense<0.000000e+00> : vector<8xf32>
      %56 = vector.multi_reduction <add>, %55, %cst_27 [1] : vector<8x128xf32> to vector<8xf32>
      %57 = vector.shape_cast %56 : vector<8xf32> to vector<8x1xf32>
      %cst_28 = arith.constant 1.000000e-24 : f32
      %58 = vector.broadcast %cst_28 : f32 to vector<8x1xf32>
      %59 = arith.maximumf %57, %58 : vector<8x1xf32>
      %60 = math.rsqrt %59 : vector<8x1xf32>
      %61 = vector.broadcast %60 : vector<8x1xf32> to vector<8x128xf32>
      %62 = arith.mulf %54, %61 : vector<8x128xf32>
      %c0_29 = arith.constant 0 : index
      %c0_30 = arith.constant 0 : index
      %c0_31 = arith.constant 0 : index
      %63 = vector.load %arg14[%c0_29, %c0_30, %c0_31] : memref<1x8x128xf32, #tpu.memory_space<vmem>>, vector<1x8x128xf32>
      %64 = vector.shape_cast %63 : vector<1x8x128xf32> to vector<8x128xf32>
      %65 = vector.shape_cast %62 : vector<8x128xf32> to vector<1x8x128xf32>
      tpu.vector_store %arg14[%c0_29, %c0_30, %c0_31], %65 {strides = array<i32>} : memref<1x8x128xf32, #tpu.memory_space<vmem>>, vector<1x8x128xf32>,
    } else {
    }
    return
  }
  func.func @transform_0(%arg0: i32) -> (i32, i32) {
    %c0_i32 = arith.constant 0 : i32
    %c0_i32_0 = arith.constant 0 : i32
    %c0_i32_1 = arith.constant 0 : i32
    return %c0_i32, %c0_i32_0 : i32, i32
  }
  func.func @transform_1(%arg0: i32) -> (i32, i32, i32) {
    %c0_i32 = arith.constant 0 : i32
    %c0_i32_0 = arith.constant 0 : i32
    %c0_i32_1 = arith.constant 0 : i32
    %c0_i32_2 = arith.constant 0 : i32
    return %c0_i32, %c0_i32_0, %c0_i32_1 : i32, i32, i32
  }
  func.func @transform_2(%arg0: i32) -> (i32, i32, i32) {
    %c0_i32 = arith.constant 0 : i32
    %c0_i32_0 = arith.constant 0 : i32
    %c0_i32_1 = arith.constant 0 : i32
    %c0_i32_2 = arith.constant 0 : i32
    return %c0_i32, %c0_i32_0, %c0_i32_1 : i32, i32, i32
  }
  func.func @transform_3(%arg0: i32) -> (i32, i32) {
    %c0_i32 = arith.constant 0 : i32
    %c0_i32_0 = arith.constant 0 : i32
    %c0_i32_1 = arith.constant 0 : i32
    return %c0_i32, %c0_i32_0 : i32, i32
  }
  func.func @transform_4(%arg0: i32) -> (i32, i32) {
    %c0_i32 = arith.constant 0 : i32
    %c0_i32_0 = arith.constant 0 : i32
    %c0_i32_1 = arith.constant 0 : i32
    return %c0_i32, %c0_i32_0 : i32, i32
  }
  func.func @transform_5(%arg0: i32) -> (i32, i32) {
    %c0_i32 = arith.constant 0 : i32
    %c0_i32_0 = arith.constant 0 : i32
    %c0_i32_1 = arith.constant 0 : i32
    return %c0_i32, %c0_i32_0 : i32, i32
  }
  func.func @transform_6(%arg0: i32) -> (i32, i32) {
    %c0_i32 = arith.constant 0 : i32
    %c0_i32_0 = arith.constant 0 : i32
    %c0_i32_1 = arith.constant 0 : i32
    return %c0_i32, %c0_i32_0 : i32, i32
  }
  func.func @transform_7(%arg0: i32) -> (i32, i32) {
    %c0_i32 = arith.constant 0 : i32
    %c0_i32_0 = arith.constant 0 : i32
    %c0_i32_1 = arith.constant 0 : i32
    return %c0_i32, %c0_i32_0 : i32, i32
  }
  func.func @transform_8(%arg0: i32) -> (i32, i32) {
    %c0_i32 = arith.constant 0 : i32
    %c0_i32_0 = arith.constant 0 : i32
    %c0_i32_1 = arith.constant 0 : i32
    return %c0_i32, %c0_i32_0 : i32, i32
  }
  func.func @transform_9(%arg0: i32) -> (i32, i32) {
    %c0_i32 = arith.constant 0 : i32
    %c0_i32_0 = arith.constant 0 : i32
    %c0_i32_1 = arith.constant 0 : i32
    return %c0_i32, %c0_i32_0 : i32, i32
  }
  func.func @transform_10(%arg0: i32) -> (i32, i32) {
    %c0_i32 = arith.constant 0 : i32
    %c0_i32_0 = arith.constant 0 : i32
    %c0_i32_1 = arith.constant 0 : i32
    return %c0_i32, %c0_i32_0 : i32, i32
  }
  func.func @transform_11(%arg0: i32) -> (i32, i32) {
    %c0_i32 = arith.constant 0 : i32
    %c0_i32_0 = arith.constant 0 : i32
    %c0_i32_1 = arith.constant 0 : i32
    return %c0_i32, %c0_i32_0 : i32, i32
  }
  func.func @transform_12(%arg0: i32) -> (i32, i32) {
    %c0_i32 = arith.constant 0 : i32
    %c0_i32_0 = arith.constant 0 : i32
    %c0_i32_1 = arith.constant 0 : i32
    return %c0_i32, %c0_i32_0 : i32, i32
  }
  func.func @transform_13(%arg0: i32) -> (i32, i32, i32) {
    %c0_i32 = arith.constant 0 : i32
    %c0_i32_0 = arith.constant 0 : i32
    %c0_i32_1 = arith.constant 0 : i32
    return %arg0, %c0_i32, %c0_i32_0 : i32, i32, i32
  }
}

</mosaic_0001>

<llo_original>
// kernel: tfood_forward.1
$region0: #{tfood_forward.1}
  #allocation0 [shape = 'u32[]', space=smem, size = 0x4, offset = 0x4, fixed_abs, tag = 'smem constant byte address 0x4 - core index']
  #allocation1 [shape = 'u32[144,128]{1,0:T(1,128)}', space=vmem, size = 0x12000, scoped, tag = 'internal scratch']
  %s0 = inlined_call_operand.vmem [shape: bf16[16,128], index: 0, kind: input, shape index: {}]
  %s1 = inlined_call_operand.vmem [shape: bf16[2,128,128], index: 1, kind: input, shape index: {}]
  %s2 = inlined_call_operand.vmem [shape: f32[2,1,128], index: 2, kind: input, shape index: {}]
  %s3 = inlined_call_operand.vmem [shape: bf16[128,128], index: 3, kind: input, shape index: {}]
  %s4 = inlined_call_operand.vmem [shape: f32[1,128], index: 4, kind: input, shape index: {}]
  %s5 = inlined_call_operand.vmem [shape: bf16[8,256], index: 5, kind: input, shape index: {}]
  %s6 = inlined_call_operand.vmem [shape: bf16[256,128], index: 6, kind: input, shape index: {}]
  %s7 = inlined_call_operand.vmem [shape: f32[1,128], index: 7, kind: input, shape index: {}]
  %s8 = inlined_call_operand.vmem [shape: f32[1,128], index: 8, kind: input, shape index: {}]
  %s9 = inlined_call_operand.vmem [shape: bf16[128,128], index: 9, kind: input, shape index: {}]
  %s10 = inlined_call_operand.vmem [shape: f32[1,128], index: 10, kind: input, shape index: {}]
  %s11 = inlined_call_operand.vmem [shape: bf16[128,128], index: 11, kind: input, shape index: {}]
  %s12 = inlined_call_operand.vmem [shape: f32[1,128], index: 12, kind: input, shape index: {}]
  %s13 = inlined_call_operand.vmem [shape: f32[2,8,128], index: 13, kind: output, shape index: {}]
  %s14 = sld [smem:[#allocation0]]
  $region93: #{tfood_forward.1} parent=0
    _
  %s16 = ssub.s32 1, %s14
  %s17 = scalar_select 0, %s16, %s14
  loop: start=0, step=1, limit=4
  $region2: #{tfood_forward.1} parent=0 // loop_pre_header
    _
  $region3: #{tfood_forward.1} parent=0 // loop_header
    %s19 = sphi 0, %s23
    %p20 = scmp.ge.s32.totalorder %s19, 4
    %s27 = sphi 0, %s27
    %s29 = sphi 0, %s27
    %s30 = sphi 0, %s29
    %s44 = sphi 0, %s30
    %s48 = sphi 0, %s48
    %s50 = sphi 0, %s48
    %s51 = sphi 0, %s50
    %s65 = sphi 0, %s51
    %s69 = sphi 0, %s69
    %s71 = sphi 0, %s69
    %s72 = sphi 0, %s71
    %s86 = sphi 0, %s72
    %s90 = sphi 0, %s90
    %s92 = sphi 0, %s90
    %s93 = sphi 0, %s92
    %s107 = sphi 0, %s93
    %s111 = sphi 0, %s111
    %s113 = sphi 0, %s111
    %s114 = sphi 0, %s113
    %s128 = sphi 0, %s114
    %s132 = sphi 0, %s132
    %s134 = sphi 0, %s132
    %s135 = sphi 0, %s134
    %s149 = sphi 0, %s135
    %s153 = sphi 0, %s153
    %s155 = sphi 0, %s153
    %s156 = sphi 0, %s155
    %s170 = sphi 0, %s156
    %s174 = sphi 0, %s174
    %s176 = sphi 0, %s174
    %s177 = sphi 0, %s176
    %s191 = sphi 0, %s177
    %s195 = sphi 0, %s195
    %s197 = sphi 0, %s195
    %s198 = sphi 0, %s197
    %s212 = sphi 0, %s198
    %s216 = sphi 0, %s216
    %s218 = sphi 0, %s216
    %s219 = sphi 0, %s218
    %s233 = sphi 0, %s219
    %s237 = sphi 0, %s237
    %s239 = sphi 0, %s237
    %s240 = sphi 0, %s239
    %s254 = sphi 0, %s240
    %s258 = sphi 0, %s258
    %s260 = sphi 0, %s258
    %s261 = sphi 0, %s260
    %s275 = sphi 0, %s261
    %s279 = sphi 0, %s279
    %s281 = sphi 0, %s279
    %s282 = sphi 0, %s281
    %s296 = sphi 0, %s282
    %s302 = sphi 0, %s304
    %s305 = sphi 0, %s302
    %s306 = sphi 0, %s305
    %s322 = sphi 0, %s306
  $region4: #{tfood_forward.1} parent=0 // loop_header_branch
    %22 = sbr.rel (%p20) target = $region8
  $region5: #{tfood_forward.1} parent=0 // loop_body
    %s24 = ssub.s32 %s19, 1
    %s25 = ssub.s32 %s19, 2
    %s26 = sadd.s32 %s19, 1
    %s28 = sadd.s32 %s27, 1
    %p31 = scmp.eq.s32.totalorder %s19, 1
    %p32 = scmp.ne.s32.totalorder %s27, %s29
    %p33 = scmp.eq.s32.totalorder %s19, 0
    %p34 = por %p32, %p33
    %p35 = scmp.ne.s32.totalorder %s27, %s29
    %p36 = scmp.eq.s32.totalorder %s24, 1
    %p37 = por %p35, %p36
    %p38 = scmp.ne.s32.totalorder %s29, %s30
    %p39 = scmp.eq.s32.totalorder %s24, 0
    %p40 = por %p38, %p39
    %p41 = scmp.ne.s32.totalorder %s29, %s30
    %p42 = scmp.eq.s32.totalorder %s25, 1
    %p43 = por %p41, %p42
    %p45 = scmp.ne.s32.totalorder %s30, %s44
    %p46 = scmp.eq.s32.totalorder %s25, 0
    %p47 = por %p45, %p46
    %s49 = sadd.s32 %s48, 1
    %p52 = scmp.eq.s32.totalorder %s19, 1
    %p53 = scmp.ne.s32.totalorder %s48, %s50
    %p54 = scmp.eq.s32.totalorder %s19, 0
    %p55 = por %p53, %p54
    %p56 = scmp.ne.s32.totalorder %s48, %s50
    %p57 = scmp.eq.s32.totalorder %s24, 1
    %p58 = por %p56, %p57
    %p59 = scmp.ne.s32.totalorder %s50, %s51
    %p60 = scmp.eq.s32.totalorder %s24, 0
    %p61 = por %p59, %p60
    %p62 = scmp.ne.s32.totalorder %s50, %s51
    %p63 = scmp.eq.s32.totalorder %s25, 1
    %p64 = por %p62, %p63
    %p66 = scmp.ne.s32.totalorder %s51, %s65
    %p67 = scmp.eq.s32.totalorder %s25, 0
    %p68 = por %p66, %p67
    %s70 = sadd.s32 %s69, 1
    %p73 = scmp.eq.s32.totalorder %s19, 1
    %p74 = scmp.ne.s32.totalorder %s69, %s71
    %p75 = scmp.eq.s32.totalorder %s19, 0
    %p76 = por %p74, %p75
    %p77 = scmp.ne.s32.totalorder %s69, %s71
    %p78 = scmp.eq.s32.totalorder %s24, 1
    %p79 = por %p77, %p78
    %p80 = scmp.ne.s32.totalorder %s71, %s72
    %p81 = scmp.eq.s32.totalorder %s24, 0
    %p82 = por %p80, %p81
    %p83 = scmp.ne.s32.totalorder %s71, %s72
    %p84 = scmp.eq.s32.totalorder %s25, 1
    %p85 = por %p83, %p84
    %p87 = scmp.ne.s32.totalorder %s72, %s86
    %p88 = scmp.eq.s32.totalorder %s25, 0
    %p89 = por %p87, %p88
    %s91 = sadd.s32 %s90, 1
    %p94 = scmp.eq.s32.totalorder %s19, 1
    %p95 = scmp.ne.s32.totalorder %s90, %s92
    %p96 = scmp.eq.s32.totalorder %s19, 0
    %p97 = por %p95, %p96
    %p98 = scmp.ne.s32.totalorder %s90, %s92
    %p99 = scmp.eq.s32.totalorder %s24, 1
    %p100 = por %p98, %p99
    %p101 = scmp.ne.s32.totalorder %s92, %s93
    %p102 = scmp.eq.s32.totalorder %s24, 0
    %p103 = por %p101, %p102
    %p104 = scmp.ne.s32.totalorder %s92, %s93
    %p105 = scmp.eq.s32.totalorder %s25, 1
    %p106 = por %p104, %p105
    %p108 = scmp.ne.s32.totalorder %s93, %s107
    %p109 = scmp.eq.s32.totalorder %s25, 0
    %p110 = por %p108, %p109
    %s112 = sadd.s32 %s111, 1
    %p115 = scmp.eq.s32.totalorder %s19, 1
    %p116 = scmp.ne.s32.totalorder %s111, %s113
    %p117 = scmp.eq.s32.totalorder %s19, 0
    %p118 = por %p116, %p117
    %p119 = scmp.ne.s32.totalorder %s111, %s113
    %p120 = scmp.eq.s32.totalorder %s24, 1
    %p121 = por %p119, %p120
    %p122 = scmp.ne.s32.totalorder %s113, %s114
    %p123 = scmp.eq.s32.totalorder %s24, 0
    %p124 = por %p122, %p123
    %p125 = scmp.ne.s32.totalorder %s113, %s114
    %p126 = scmp.eq.s32.totalorder %s25, 1
    %p127 = por %p125, %p126
    %p129 = scmp.ne.s32.totalorder %s114, %s128
    %p130 = scmp.eq.s32.totalorder %s25, 0
    %p131 = por %p129, %p130
    %s133 = sadd.s32 %s132, 1
    %p136 = scmp.eq.s32.totalorder %s19, 1
    %p137 = scmp.ne.s32.totalorder %s132, %s134
    %p138 = scmp.eq.s32.totalorder %s19, 0
    %p139 = por %p137, %p138
    %p140 = scmp.ne.s32.totalorder %s132, %s134
    %p141 = scmp.eq.s32.totalorder %s24, 1
    %p142 = por %p140, %p141
    %p143 = scmp.ne.s32.totalorder %s134, %s135
    %p144 = scmp.eq.s32.totalorder %s24, 0
    %p145 = por %p143, %p144
    %p146 = scmp.ne.s32.totalorder %s134, %s135
    %p147 = scmp.eq.s32.totalorder %s25, 1
    %p148 = por %p146, %p147
    %p150 = scmp.ne.s32.totalorder %s135, %s149
    %p151 = scmp.eq.s32.totalorder %s25, 0
    %p152 = por %p150, %p151
    %s154 = sadd.s32 %s153, 1
    %p157 = scmp.eq.s32.totalorder %s19, 1
    %p158 = scmp.ne.s32.totalorder %s153, %s155
    %p159 = scmp.eq.s32.totalorder %s19, 0
    %p160 = por %p158, %p159
    %p161 = scmp.ne.s32.totalorder %s153, %s155
    %p162 = scmp.eq.s32.totalorder %s24, 1
    %p163 = por %p161, %p162
    %p164 = scmp.ne.s32.totalorder %s155, %s156
    %p165 = scmp.eq.s32.totalorder %s24, 0
    %p166 = por %p164, %p165
    %p167 = scmp.ne.s32.totalorder %s155, %s156
    %p168 = scmp.eq.s32.totalorder %s25, 1
    %p169 = por %p167, %p168
    %p171 = scmp.ne.s32.totalorder %s156, %s170
    %p172 = scmp.eq.s32.totalorder %s25, 0
    %p173 = por %p171, %p172
    %s175 = sadd.s32 %s174, 1
    %p178 = scmp.eq.s32.totalorder %s19, 1
    %p179 = scmp.ne.s32.totalorder %s174, %s176
    %p180 = scmp.eq.s32.totalorder %s19, 0
    %p181 = por %p179, %p180
    %p182 = scmp.ne.s32.totalorder %s174, %s176
    %p183 = scmp.eq.s32.totalorder %s24, 1
    %p184 = por %p182, %p183
    %p185 = scmp.ne.s32.totalorder %s176, %s177
    %p186 = scmp.eq.s32.totalorder %s24, 0
    %p187 = por %p185, %p186
    %p188 = scmp.ne.s32.totalorder %s176, %s177
    %p189 = scmp.eq.s32.totalorder %s25, 1
    %p190 = por %p188, %p189
    %p192 = scmp.ne.s32.totalorder %s177, %s191
    %p193 = scmp.eq.s32.totalorder %s25, 0
    %p194 = por %p192, %p193
    %s196 = sadd.s32 %s195, 1
    %p199 = scmp.eq.s32.totalorder %s19, 1
    %p200 = scmp.ne.s32.totalorder %s195, %s197
    %p201 = scmp.eq.s32.totalorder %s19, 0
    %p202 = por %p200, %p201
    %p203 = scmp.ne.s32.totalorder %s195, %s197
    %p204 = scmp.eq.s32.totalorder %s24, 1
    %p205 = por %p203, %p204
    %p206 = scmp.ne.s32.totalorder %s197, %s198
    %p207 = scmp.eq.s32.totalorder %s24, 0
    %p208 = por %p206, %p207
    %p209 = scmp.ne.s32.totalorder %s197, %s198
    %p210 = scmp.eq.s32.totalorder %s25, 1
    %p211 = por %p209, %p210
    %p213 = scmp.ne.s32.totalorder %s198, %s212
    %p214 = scmp.eq.s32.totalorder %s25, 0
    %p215 = por %p213, %p214
    %s217 = sadd.s32 %s216, 1
    %p220 = scmp.eq.s32.totalorder %s19, 1
    %p221 = scmp.ne.s32.totalorder %s216, %s218
    %p222 = scmp.eq.s32.totalorder %s19, 0
    %p223 = por %p221, %p222
    %p224 = scmp.ne.s32.totalorder %s216, %s218
    %p225 = scmp.eq.s32.totalorder %s24, 1
    %p226 = por %p224, %p225
    %p227 = scmp.ne.s32.totalorder %s218, %s219
    %p228 = scmp.eq.s32.totalorder %s24, 0
    %p229 = por %p227, %p228
    %p230 = scmp.ne.s32.totalorder %s218, %s219
    %p231 = scmp.eq.s32.totalorder %s25, 1
    %p232 = por %p230, %p231
    %p234 = scmp.ne.s32.totalorder %s219, %s233
    %p235 = scmp.eq.s32.totalorder %s25, 0
    %p236 = por %p234, %p235
    %s238 = sadd.s32 %s237, 1
    %p241 = scmp.eq.s32.totalorder %s19, 1
    %p242 = scmp.ne.s32.totalorder %s237, %s239
    %p243 = scmp.eq.s32.totalorder %s19, 0
    %p244 = por %p242, %p243
    %p245 = scmp.ne.s32.totalorder %s237, %s239
    %p246 = scmp.eq.s32.totalorder %s24, 1
    %p247 = por %p245, %p246
    %p248 = scmp.ne.s32.totalorder %s239, %s240
    %p249 = scmp.eq.s32.totalorder %s24, 0
    %p250 = por %p248, %p249
    %p251 = scmp.ne.s32.totalorder %s239, %s240
    %p252 = scmp.eq.s32.totalorder %s25, 1
    %p253 = por %p251, %p252
    %p255 = scmp.ne.s32.totalorder %s240, %s254
    %p256 = scmp.eq.s32.totalorder %s25, 0
    %p257 = por %p255, %p256
    %s259 = sadd.s32 %s258, 1
    %p262 = scmp.eq.s32.totalorder %s19, 1
    %p263 = scmp.ne.s32.totalorder %s258, %s260
    %p264 = scmp.eq.s32.totalorder %s19, 0
    %p265 = por %p263, %p264
    %p266 = scmp.ne.s32.totalorder %s258, %s260
    %p267 = scmp.eq.s32.totalorder %s24, 1
    %p268 = por %p266, %p267
    %p269 = scmp.ne.s32.totalorder %s260, %s261
    %p270 = scmp.eq.s32.totalorder %s24, 0
    %p271 = por %p269, %p270
    %p272 = scmp.ne.s32.totalorder %s260, %s261
    %p273 = scmp.eq.s32.totalorder %s25, 1
    %p274 = por %p272, %p273
    %p276 = scmp.ne.s32.totalorder %s261, %s275
    %p277 = scmp.eq.s32.totalorder %s25, 0
    %p278 = por %p276, %p277
    %s280 = sadd.s32 %s279, 1
    %p283 = scmp.eq.s32.totalorder %s19, 1
    %p284 = scmp.ne.s32.totalorder %s279, %s281
    %p285 = scmp.eq.s32.totalorder %s19, 0
    %p286 = por %p284, %p285
    %p287 = scmp.ne.s32.totalorder %s279, %s281
    %p288 = scmp.eq.s32.totalorder %s24, 1
    %p289 = por %p287, %p288
    %p290 = scmp.ne.s32.totalorder %s281, %s282
    %p291 = scmp.eq.s32.totalorder %s24, 0
    %p292 = por %p290, %p291
    %p293 = scmp.ne.s32.totalorder %s281, %s282
    %p294 = scmp.eq.s32.totalorder %s25, 1
    %p295 = por %p293, %p294
    %p297 = scmp.ne.s32.totalorder %s282, %s296
    %p298 = scmp.eq.s32.totalorder %s25, 0
    %p299 = por %p297, %p298
    %s300 = ssub.s32 %s19, %s26
    %p301 = scmp.eq.s32.totalorder %s300, 0
    %s303 = sadd.s32 %s302, 1
    %s304 = scalar_select %p301, %s302, %s303
    %p307 = pneg %p301
    %p308 = scmp.eq.s32.totalorder %s19, 1
    %p309 = por %p307, %p308
    %p310 = scmp.ne.s32.totalorder %s302, %s305
    %p311 = scmp.eq.s32.totalorder %s19, 0
    %p312 = por %p310, %p311
    %p313 = scmp.ne.s32.totalorder %s302, %s305
    %p314 = scmp.eq.s32.totalorder %s24, 1
    %p315 = por %p313, %p314
    %p316 = scmp.ne.s32.totalorder %s305, %s306
    %p317 = scmp.eq.s32.totalorder %s24, 0
    %p318 = por %p316, %p317
    %p319 = scmp.ne.s32.totalorder %s305, %s306
    %p320 = scmp.eq.s32.totalorder %s25, 1
    %p321 = por %p319, %p320
    %p323 = scmp.ne.s32.totalorder %s306, %s322
    %p324 = scmp.eq.s32.totalorder %s25, 0
    %p325 = por %p323, %p324
    %p326 = scmp.le.s32.totalorder 1, %s19
    %p327 = scmp.lt.s32.totalorder %s19, 3
    %p328 = pnand %p326, %p327
    %p329 = pneg %p328
    // Predicated region
    $region9: #{tfood_forward.1} parent=5 // pred_check
      _
    $region10: #{tfood_forward.1} parent=5 // pred_check_branch
      %331 = sbr.rel (%p328) target = $region12
    $region11: #{tfood_forward.1} parent=5 // pred_region
      %s332 = ssub.s32 %s19, 1
      // Predicated region
      $region13: #{tfood_forward.1} parent=11 // pred_check
        %p333 = pneg %p40
      $region14: #{tfood_forward.1} parent=11 // pred_check_branch
        %335 = sbr.rel (%p333) target = $region16
      $region15: #{tfood_forward.1} parent=11 // pred_region
        _
      $region16: #{tfood_forward.1} parent=11 // pred_fallthru
        _
      // Predicated region
      $region17: #{tfood_forward.1} parent=11 // pred_check
        %p336 = pneg %p61
      $region18: #{tfood_forward.1} parent=11 // pred_check_branch
        %338 = sbr.rel (%p336) target = $region20
      $region19: #{tfood_forward.1} parent=11 // pred_region
        _
      $region20: #{tfood_forward.1} parent=11 // pred_fallthru
        _
      // Predicated region
      $region21: #{tfood_forward.1} parent=11 // pred_check
        %p339 = pneg %p82
      $region22: #{tfood_forward.1} parent=11 // pred_check_branch
        %341 = sbr.rel (%p339) target = $region24
      $region23: #{tfood_forward.1} parent=11 // pred_region
        _
      $region24: #{tfood_forward.1} parent=11 // pred_fallthru
        _
      // Predicated region
      $region25: #{tfood_forward.1} parent=11 // pred_check
        %p342 = pneg %p103
      $region26: #{tfood_forward.1} parent=11 // pred_check_branch
        %344 = sbr.rel (%p342) target = $region28
      $region27: #{tfood_forward.1} parent=11 // pred_region
        _
      $region28: #{tfood_forward.1} parent=11 // pred_fallthru
        _
      // Predicated region
      $region29: #{tfood_forward.1} parent=11 // pred_check
        %p345 = pneg %p124
      $region30: #{tfood_forward.1} parent=11 // pred_check_branch
        %347 = sbr.rel (%p345) target = $region32
      $region31: #{tfood_forward.1} parent=11 // pred_region
        _
      $region32: #{tfood_forward.1} parent=11 // pred_fallthru
        _
      // Predicated region
      $region33: #{tfood_forward.1} parent=11 // pred_check
        %p348 = pneg %p145
      $region34: #{tfood_forward.1} parent=11 // pred_check_branch
        %350 = sbr.rel (%p348) target = $region36
      $region35: #{tfood_forward.1} parent=11 // pred_region
        _
      $region36: #{tfood_forward.1} parent=11 // pred_fallthru
        _
      // Predicated region
      $region37: #{tfood_forward.1} parent=11 // pred_check
        %p351 = pneg %p166
      $region38: #{tfood_forward.1} parent=11 // pred_check_branch
        %353 = sbr.rel (%p351) target = $region40
      $region39: #{tfood_forward.1} parent=11 // pred_region
        _
      $region40: #{tfood_forward.1} parent=11 // pred_fallthru
        _
      // Predicated region
      $region41: #{tfood_forward.1} parent=11 // pred_check
        %p354 = pneg %p187
      $region42: #{tfood_forward.1} parent=11 // pred_check_branch
        %356 = sbr.rel (%p354) target = $region44
      $region43: #{tfood_forward.1} parent=11 // pred_region
        _
      $region44: #{tfood_forward.1} parent=11 // pred_fallthru
        _
      // Predicated region
      $region45: #{tfood_forward.1} parent=11 // pred_check
        %p357 = pneg %p208
      $region46: #{tfood_forward.1} parent=11 // pred_check_branch
        %359 = sbr.rel (%p357) target = $region48
      $region47: #{tfood_forward.1} parent=11 // pred_region
        _
      $region48: #{tfood_forward.1} parent=11 // pred_fallthru
        _
      // Predicated region
      $region49: #{tfood_forward.1} parent=11 // pred_check
        %p360 = pneg %p229
      $region50: #{tfood_forward.1} parent=11 // pred_check_branch
        %362 = sbr.rel (%p360) target = $region52
      $region51: #{tfood_forward.1} parent=11 // pred_region
        _
      $region52: #{tfood_forward.1} parent=11 // pred_fallthru
        _
      // Predicated region
      $region53: #{tfood_forward.1} parent=11 // pred_check
        %p363 = pneg %p250
      $region54: #{tfood_forward.1} parent=11 // pred_check_branch
        %365 = sbr.rel (%p363) target = $region56
      $region55: #{tfood_forward.1} parent=11 // pred_region
        _
      $region56: #{tfood_forward.1} parent=11 // pred_fallthru
        _
      // Predicated region
      $region57: #{tfood_forward.1} parent=11 // pred_check
        %p366 = pneg %p271
      $region58: #{tfood_forward.1} parent=11 // pred_check_branch
        %368 = sbr.rel (%p366) target = $region60
      $region59: #{tfood_forward.1} parent=11 // pred_region
        _
      $region60: #{tfood_forward.1} parent=11 // pred_fallthru
        _
      // Predicated region
      $region61: #{tfood_forward.1} parent=11 // pred_check
        %p369 = pneg %p292
      $region62: #{tfood_forward.1} parent=11 // pred_check_branch
        %371 = sbr.rel (%p369) target = $region64
      $region63: #{tfood_forward.1} parent=11 // pred_region
        _
      $region64: #{tfood_forward.1} parent=11 // pred_fallthru
        _
    $region12: #{tfood_forward.1} parent=5 // pred_fallthru
      _
    %p372 = scmp.lt.s32.totalorder %s19, 2
    // Predicated region
    $region65: #{tfood_forward.1} parent=5 // pred_check
      %p373 = pneg %p372
    $region66: #{tfood_forward.1} parent=5 // pred_check_branch
      %375 = sbr.rel (%p373) target = $region68
    $region67: #{tfood_forward.1} parent=5 // pred_region
      _
    $region68: #{tfood_forward.1} parent=5 // pred_fallthru
      _
    %p376 = scmp.le.s32.totalorder 1, %s19
    %p377 = scmp.lt.s32.totalorder %s19, 3
    %p378 = pnand %p376, %p377
    %p379 = pneg %p378
    // Predicated region
    $region69: #{tfood_forward.1} parent=5 // pred_check
      _
    $region70: #{tfood_forward.1} parent=5 // pred_check_branch
      %381 = sbr.rel (%p378) target = $region72
    $region71: #{tfood_forward.1} parent=5 // pred_region
      %s382 = ssub.s32 %s19, 1
      %p383 = pneg %p40
      %p384 = pneg %p37
      %p385 = pneg %p61
      %p386 = pneg %p58
      %p387 = pneg %p82
      %p388 = pneg %p79
      %p389 = pneg %p103
      %p390 = pneg %p100
      %p391 = pneg %p124
      %p392 = pneg %p121
      %p393 = pneg %p145
      %p394 = pneg %p142
      %p395 = pneg %p166
      %p396 = pneg %p163
      %p397 = pneg %p187
      %p398 = pneg %p184
      %p399 = pneg %p208
      %p400 = pneg %p205
      %p401 = pneg %p229
      %p402 = pneg %p226
      %p403 = pneg %p250
      %p404 = pneg %p247
      %p405 = pneg %p271
      %p406 = pneg %p268
      %p407 = pneg %p292
      %p408 = pneg %p289
      %p409 = pneg %p318
      %p410 = pneg %p315
      %p411 = scmp.lt.s32.totalorder %s24, 1
      %s412 = scalar_select %p411, %s24, 1
      %s413 = smul.addr %s412, 8
      %s414 = scalar_lea.vmem %s13, %s413
      %p415 = scmp.lt.s32.totalorder %s24, 1
      %s416 = scalar_select %p415, %s24, 1
      %s417 = smul.addr %s416, 8
      %s418 = scalar_lea.vmem %s13, %s417
      %p420 = scmp.eq.s32.totalorder %s24, 0
      // Predicated region
      $region73: #{tfood_forward.1} parent=71 // pred_check
        %p421 = pneg %p420
      $region74: #{tfood_forward.1} parent=71 // pred_check_branch
        %423 = sbr.rel (%p421) target = $region76
      $region75: #{tfood_forward.1} parent=71 // pred_region
        %v424 = vld [vmem:[%s0] sm:$0xf]
        %v425 = vld [vmem:[%s0 + $0x4] sm:$0xf]
        %v426 = vld [vmem:[%s1] sm:$0xf]
        %v427 = vld [vmem:[%s1 + $0x4] sm:$0xf]
        %v428 = vld [vmem:[%s1 + $0x8] sm:$0xf]
        %v429 = vld [vmem:[%s1 + $0xc] sm:$0xf]
        %v430 = vld [vmem:[%s1 + $0x10] sm:$0xf]
        %v431 = vld [vmem:[%s1 + $0x14] sm:$0xf]
        %v432 = vld [vmem:[%s1 + $0x18] sm:$0xf]
        %v433 = vld [vmem:[%s1 + $0x1c] sm:$0xf]
        %v434 = vld [vmem:[%s1 + $0x20] sm:$0xf]
        %v435 = vld [vmem:[%s1 + $0x24] sm:$0xf]
        %v436 = vld [vmem:[%s1 + $0x28] sm:$0xf]
        %v437 = vld [vmem:[%s1 + $0x2c] sm:$0xf]
        %v438 = vld [vmem:[%s1 + $0x30] sm:$0xf]
        %v439 = vld [vmem:[%s1 + $0x34] sm:$0xf]
        %v440 = vld [vmem:[%s1 + $0x38] sm:$0xf]
        %v441 = vld [vmem:[%s1 + $0x3c] sm:$0xf]
        %v442 = vld [vmem:[%s2] sm:$0x1]
        %v444 = vlaneseq
        %v445 = vshrl.u32 %v444, 7
        %v446 = vsub.s32 0, %v445
        %v447 = vrot.slane %v442, %v446
        %v451 = vunpack.c.l.b16 %v424
        %v452 = vunpack.c.l.b16 %v425
        %v453 = vpack.c.b16 %v452, %v451
        %v471 = vunpack.c.l.b16 %v426
        %v472 = vunpack.c.l.b16 %v427
        %v473 = vunpack.c.l.b16 %v428
        %v474 = vunpack.c.l.b16 %v429
        %v475 = vunpack.c.l.b16 %v430
        %v476 = vunpack.c.l.b16 %v431
        %v477 = vunpack.c.l.b16 %v432
        %v478 = vunpack.c.l.b16 %v433
        %v479 = vunpack.c.l.b16 %v434
        %v480 = vunpack.c.l.b16 %v435
        %v481 = vunpack.c.l.b16 %v436
        %v482 = vunpack.c.l.b16 %v437
        %v483 = vunpack.c.l.b16 %v438
        %v484 = vunpack.c.l.b16 %v439
        %v485 = vunpack.c.l.b16 %v440
        %v486 = vunpack.c.l.b16 %v441
        %v487 = vpack.c.b16 %v472, %v471
        %v488 = vpack.c.b16 %v474, %v473
        %v489 = vpack.c.b16 %v476, %v475
        %v490 = vpack.c.b16 %v478, %v477
        %v491 = vpack.c.b16 %v480, %v479
        %v492 = vpack.c.b16 %v482, %v481
        %v493 = vpack.c.b16 %v484, %v483
        %v494 = vpack.c.b16 %v486, %v485
        %503 = vmatprep.subr.bf16.mxu0 0
        %504 = vmatpush1.bf16.msra.mxu0 %v487
        %505 = vmatprep.subr.bf16.mxu0 0
        %506 = vmatpush1.bf16.msra.mxu0 %v488
        %507 = vmatprep.subr.bf16.mxu0 0
        %508 = vmatpush1.bf16.msra.mxu0 %v489
        %509 = vmatprep.subr.bf16.mxu0 0
        %510 = vmatpush1.bf16.msra.mxu0 %v490
        %511 = vmatprep.subr.bf16.mxu0 0
        %512 = vmatpush1.bf16.msra.mxu0 %v491
        %513 = vmatprep.subr.bf16.mxu0 0
        %514 = vmatpush1.bf16.msra.mxu0 %v492
        %515 = vmatprep.subr.bf16.mxu0 0
        %516 = vmatpush1.bf16.msra.mxu0 %v493
        %517 = vmatprep.subr.bf16.mxu0 0
        %518 = vmatpush1.bf16.msra.mxu0 %v494
        %519 = vmatprep.subr.bf16.mxu0 0
        %520 = vmatpush1.bf16.msra.mxu0 0
        %521 = vmatprep.subr.bf16.mxu0 0
        %522 = vmatpush1.bf16.msra.mxu0 0
        %523 = vmatprep.subr.bf16.mxu0 0
        %524 = vmatpush1.bf16.msra.mxu0 0
        %525 = vmatprep.subr.bf16.mxu0 0
        %526 = vmatpush1.bf16.msra.mxu0 0
        %527 = vmatprep.subr.bf16.mxu0 0
        %528 = vmatpush1.bf16.msra.mxu0 0
        %529 = vmatprep.subr.bf16.mxu0 0
        %530 = vmatpush1.bf16.msra.mxu0 0
        %531 = vmatprep.subr.bf16.mxu0 0
        %532 = vmatpush1.bf16.msra.mxu0 0
        %533 = vmatprep.subr.bf16.mxu0 0
        %534 = vmatpush1.bf16.msra.mxu0 0
        %535 = vmatprep.mubr.bf16.mxu0 0
        %536 = vmatmul.mubr.bf16.gmra.mrb[0].mxu0 %v453
        %v537 = vpop.f32.mrb[0].mxu0
        %v538 = vadd.f32 %v447, %v537
        %v539 = vpop.f32.mrb[0].mxu0
        %v540 = vpop.f32.mrb[0].mxu0
        %v541 = vadd.f32 %v447, %v540
        %v542 = vpop.f32.mrb[0].mxu0
        %543 = vdwg.mxu0
        %v544 = vtanh.pop %v538
        %v545 = vtanh.pop %v541
        %v546 = vpack.c.bf16 %v545, %v544
        %s547 = scalar_lea.vmem %s1, 64
        %v548 = vld [vmem:[%s547] sm:$0xf]
        %v549 = vld [vmem:[%s547 + $0x4] sm:$0xf]
        %v550 = vld [vmem:[%s547 + $0x8] sm:$0xf]
        %v551 = vld [vmem:[%s547 + $0xc] sm:$0xf]
        %v552 = vld [vmem:[%s547 + $0x10] sm:$0xf]
        %v553 = vld [vmem:[%s547 + $0x14] sm:$0xf]
        %v554 = vld [vmem:[%s547 + $0x18] sm:$0xf]
        %v555 = vld [vmem:[%s547 + $0x1c] sm:$0xf]
        %v556 = vld [vmem:[%s547 + $0x20] sm:$0xf]
        %v557 = vld [vmem:[%s547 + $0x24] sm:$0xf]
        %v558 = vld [vmem:[%s547 + $0x28] sm:$0xf]
        %v559 = vld [vmem:[%s547 + $0x2c] sm:$0xf]
        %v560 = vld [vmem:[%s547 + $0x30] sm:$0xf]
        %v561 = vld [vmem:[%s547 + $0x34] sm:$0xf]
        %v562 = vld [vmem:[%s547 + $0x38] sm:$0xf]
        %v563 = vld [vmem:[%s547 + $0x3c] sm:$0xf]
        %s564 = scalar_lea.vmem %s2, 1
        %v565 = vld [vmem:[%s564] sm:$0x1]
        %v567 = vlaneseq
        %v568 = vshrl.u32 %v567, 7
        %v569 = vsub.s32 0, %v568
        %v570 = vrot.slane %v565, %v569
        %v588 = vunpack.c.l.b16 %v548
        %v589 = vunpack.c.l.b16 %v549
        %v590 = vunpack.c.l.b16 %v550
        %v591 = vunpack.c.l.b16 %v551
        %v592 = vunpack.c.l.b16 %v552
        %v593 = vunpack.c.l.b16 %v553
        %v594 = vunpack.c.l.b16 %v554
        %v595 = vunpack.c.l.b16 %v555
        %v596 = vunpack.c.l.b16 %v556
        %v597 = vunpack.c.l.b16 %v557
        %v598 = vunpack.c.l.b16 %v558
        %v599 = vunpack.c.l.b16 %v559
        %v600 = vunpack.c.l.b16 %v560
        %v601 = vunpack.c.l.b16 %v561
        %v602 = vunpack.c.l.b16 %v562
        %v603 = vunpack.c.l.b16 %v563
        %v604 = vpack.c.b16 %v589, %v588
        %v605 = vpack.c.b16 %v591, %v590
        %v606 = vpack.c.b16 %v593, %v592
        %v607 = vpack.c.b16 %v595, %v594
        %v608 = vpack.c.b16 %v597, %v596
        %v609 = vpack.c.b16 %v599, %v598
        %v610 = vpack.c.b16 %v601, %v600
        %v611 = vpack.c.b16 %v603, %v602
        %620 = vmatprep.subr.bf16.mxu0 0
        %621 = vmatpush1.bf16.msra.mxu0 %v604
        %622 = vmatprep.subr.bf16.mxu0 0
        %623 = vmatpush1.bf16.msra.mxu0 %v605
        %624 = vmatprep.subr.bf16.mxu0 0
        %625 = vmatpush1.bf16.msra.mxu0 %v606
        %626 = vmatprep.subr.bf16.mxu0 0
        %627 = vmatpush1.bf16.msra.mxu0 %v607
        %628 = vmatprep.subr.bf16.mxu0 0
        %629 = vmatpush1.bf16.msra.mxu0 %v608
        %630 = vmatprep.subr.bf16.mxu0 0
        %631 = vmatpush1.bf16.msra.mxu0 %v609
        %632 = vmatprep.subr.bf16.mxu0 0
        %633 = vmatpush1.bf16.msra.mxu0 %v610
        %634 = vmatprep.subr.bf16.mxu0 0
        %635 = vmatpush1.bf16.msra.mxu0 %v611
        %636 = vmatprep.subr.bf16.mxu0 0
        %637 = vmatpush1.bf16.msra.mxu0 0
        %638 = vmatprep.subr.bf16.mxu0 0
        %639 = vmatpush1.bf16.msra.mxu0 0
        %640 = vmatprep.subr.bf16.mxu0 0
        %641 = vmatpush1.bf16.msra.mxu0 0
        %642 = vmatprep.subr.bf16.mxu0 0
        %643 = vmatpush1.bf16.msra.mxu0 0
        %644 = vmatprep.subr.bf16.mxu0 0
        %645 = vmatpush1.bf16.msra.mxu0 0
        %646 = vmatprep.subr.bf16.mxu0 0
        %647 = vmatpush1.bf16.msra.mxu0 0
        %648 = vmatprep.subr.bf16.mxu0 0
        %649 = vmatpush1.bf16.msra.mxu0 0
        %650 = vmatprep.subr.bf16.mxu0 0
        %651 = vmatpush1.bf16.msra.mxu0 0
        %652 = vmatprep.mubr.bf16.mxu0 0
        %653 = vmatmul.mubr.bf16.gmra.mrb[0].mxu0 %v546
        %v654 = vpop.f32.mrb[0].mxu0
        %v655 = vadd.f32 %v570, %v654
        %v656 = vpop.f32.mrb[0].mxu0
        %v657 = vpop.f32.mrb[0].mxu0
        %v658 = vadd.f32 %v570, %v657
        %v659 = vpop.f32.mrb[0].mxu0
        %660 = vdwg.mxu0
        %v661 = vtanh.pop %v655
        %v662 = vtanh.pop %v658
        %v663 = vlaneseq
        %v664 = vshrl.u32 %v663, 7
        %v665 = vrot.slane %v661, 4
        %v666 = vadd.f32 %v661, %v665
        %v667 = vrot.slane %v666, 2
        %v668 = vadd.f32 %v666, %v667
        %v669 = vrot.slane %v668, 1
        %v670 = vadd.f32 %v668, %v669
        %vm671 = vcmp.eq.s32.totalorder %v664, 0
        %v672 = vsel %vm671, %v670, 0.0
        %v673 = vadd.f32 %v672, 0.0
        %v674 = vrot.slane %v662, 4
        %v675 = vadd.f32 %v662, %v674
        %v676 = vrot.slane %v675, 2
        %v677 = vadd.f32 %v675, %v676
        %v678 = vrot.slane %v677, 1
        %v679 = vadd.f32 %v677, %v678
        %vm680 = vcmp.eq.s32.totalorder %v664, 1
        %v681 = vsel %vm680, %v679, 0.0
        %v682 = vadd.f32 %v673, %v681
        %v683 = vmul.f32 %v682, 0.125
        %v684 = vpack.c.bf16 %v683, %v683
        %v685 = vld [vmem:[%s3] sm:$0xf]
        %v686 = vld [vmem:[%s3 + $0x4] sm:$0xf]
        %v687 = vld [vmem:[%s3 + $0x8] sm:$0xf]
        %v688 = vld [vmem:[%s3 + $0xc] sm:$0xf]
        %v689 = vld [vmem:[%s3 + $0x10] sm:$0xf]
        %v690 = vld [vmem:[%s3 + $0x14] sm:$0xf]
        %v691 = vld [vmem:[%s3 + $0x18] sm:$0xf]
        %v692 = vld [vmem:[%s3 + $0x1c] sm:$0xf]
        %v693 = vld [vmem:[%s3 + $0x20] sm:$0xf]
        %v694 = vld [vmem:[%s3 + $0x24] sm:$0xf]
        %v695 = vld [vmem:[%s3 + $0x28] sm:$0xf]
        %v696 = vld [vmem:[%s3 + $0x2c] sm:$0xf]
        %v697 = vld [vmem:[%s3 + $0x30] sm:$0xf]
        %v698 = vld [vmem:[%s3 + $0x34] sm:$0xf]
        %v699 = vld [vmem:[%s3 + $0x38] sm:$0xf]
        %v700 = vld [vmem:[%s3 + $0x3c] sm:$0xf]
        %v701 = vld [vmem:[%s4] sm:$0x1]
        %v703 = vlaneseq
        %v704 = vshrl.u32 %v703, 7
        %v705 = vsub.s32 0, %v704
        %v706 = vrot.slane %v701, %v705
        %v724 = vunpack.c.l.b16 %v685
        %v725 = vunpack.c.l.b16 %v686
        %v726 = vunpack.c.l.b16 %v687
        %v727 = vunpack.c.l.b16 %v688
        %v728 = vunpack.c.l.b16 %v689
        %v729 = vunpack.c.l.b16 %v690
        %v730 = vunpack.c.l.b16 %v691
        %v731 = vunpack.c.l.b16 %v692
        %v732 = vunpack.c.l.b16 %v693
        %v733 = vunpack.c.l.b16 %v694
        %v734 = vunpack.c.l.b16 %v695
        %v735 = vunpack.c.l.b16 %v696
        %v736 = vunpack.c.l.b16 %v697
        %v737 = vunpack.c.l.b16 %v698
        %v738 = vunpack.c.l.b16 %v699
        %v739 = vunpack.c.l.b16 %v700
        %v740 = vpack.c.b16 %v725, %v724
        %v741 = vpack.c.b16 %v727, %v726
        %v742 = vpack.c.b16 %v729, %v728
        %v743 = vpack.c.b16 %v731, %v730
        %v744 = vpack.c.b16 %v733, %v732
        %v745 = vpack.c.b16 %v735, %v734
        %v746 = vpack.c.b16 %v737, %v736
        %v747 = vpack.c.b16 %v739, %v738
        %756 = vmatprep.subr.bf16.mxu0 0
        %757 = vmatpush1.bf16.msra.mxu0 %v740
        %758 = vmatprep.subr.bf16.mxu0 0
        %759 = vmatpush1.bf16.msra.mxu0 %v741
        %760 = vmatprep.subr.bf16.mxu0 0
        %761 = vmatpush1.bf16.msra.mxu0 %v742
        %762 = vmatprep.subr.bf16.mxu0 0
        %763 = vmatpush1.bf16.msra.mxu0 %v743
        %764 = vmatprep.subr.bf16.mxu0 0
        %765 = vmatpush1.bf16.msra.mxu0 %v744
        %766 = vmatprep.subr.bf16.mxu0 0
        %767 = vmatpush1.bf16.msra.mxu0 %v745
        %768 = vmatprep.subr.bf16.mxu0 0
        %769 = vmatpush1.bf16.msra.mxu0 %v746
        %770 = vmatprep.subr.bf16.mxu0 0
        %771 = vmatpush1.bf16.msra.mxu0 %v747
        %772 = vmatprep.subr.bf16.mxu0 0
        %773 = vmatpush1.bf16.msra.mxu0 0
        %774 = vmatprep.subr.bf16.mxu0 0
        %775 = vmatpush1.bf16.msra.mxu0 0
        %776 = vmatprep.subr.bf16.mxu0 0
        %777 = vmatpush1.bf16.msra.mxu0 0
        %778 = vmatprep.subr.bf16.mxu0 0
        %779 = vmatpush1.bf16.msra.mxu0 0
        %780 = vmatprep.subr.bf16.mxu0 0
        %781 = vmatpush1.bf16.msra.mxu0 0
        %782 = vmatprep.subr.bf16.mxu0 0
        %783 = vmatpush1.bf16.msra.mxu0 0
        %784 = vmatprep.subr.bf16.mxu0 0
        %785 = vmatpush1.bf16.msra.mxu0 0
        %786 = vmatprep.subr.bf16.mxu0 0
        %787 = vmatpush1.bf16.msra.mxu0 0
        %788 = vmatprep.mubr.bf16.mxu0 0
        %789 = vmatmul.mubr.bf16.gmra.mrb[0].mxu0 %v684
        %v790 = vpop.f32.mrb[0].mxu0
        %v791 = vadd.f32 %v706, %v790
        %v792 = vpop.f32.mrb[0].mxu0
        %v793 = vpop.f32.mrb[0].mxu0
        %v794 = vpop.f32.mrb[0].mxu0
        %795 = vdwg.mxu0
        %v796 = vtanh.pop %v791
        %v797 = vmul.f32 %v796, %v796
        %798 = vadd.xlane.f32.xlu0 %v797
        %v799 = vpop.xlane.xlu0 %798
        %v800 = vmax.f32 %v799, 1e-24
        %v801 = vrsqrt.pop %v800
        %v802 = vmul.f32 %v796, %v801
        %803 = vst [vmem:[%s418] sm:$0xff] %v802
      $region76: #{tfood_forward.1} parent=71 // pred_fallthru
        _
      %p804 = scmp.eq.s32.totalorder %s24, 1
      // Predicated region
      $region77: #{tfood_forward.1} parent=71 // pred_check
        %p805 = pneg %p804
      $region78: #{tfood_forward.1} parent=71 // pred_check_branch
        %807 = sbr.rel (%p805) target = $region80
      $region79: #{tfood_forward.1} parent=71 // pred_region
        %v808 = vld [vmem:[%s5] sm:$0xff]
        %v809 = vld [vmem:[%s6] sm:$0xf]
        %v810 = vld [vmem:[%s6 + $0x4] sm:$0xf]
        %v811 = vld [vmem:[%s6 + $0x8] sm:$0xf]
        %v812 = vld [vmem:[%s6 + $0xc] sm:$0xf]
        %v813 = vld [vmem:[%s6 + $0x10] sm:$0xf]
        %v814 = vld [vmem:[%s6 + $0x14] sm:$0xf]
        %v815 = vld [vmem:[%s6 + $0x18] sm:$0xf]
        %v816 = vld [vmem:[%s6 + $0x1c] sm:$0xf]
        %v817 = vld [vmem:[%s6 + $0x20] sm:$0xf]
        %v818 = vld [vmem:[%s6 + $0x24] sm:$0xf]
        %v819 = vld [vmem:[%s6 + $0x28] sm:$0xf]
        %v820 = vld [vmem:[%s6 + $0x2c] sm:$0xf]
        %v821 = vld [vmem:[%s6 + $0x30] sm:$0xf]
        %v822 = vld [vmem:[%s6 + $0x34] sm:$0xf]
        %v823 = vld [vmem:[%s6 + $0x38] sm:$0xf]
        %v824 = vld [vmem:[%s6 + $0x3c] sm:$0xf]
        %v825 = vld [vmem:[%s6 + $0x40] sm:$0xf]
        %v826 = vld [vmem:[%s6 + $0x44] sm:$0xf]
        %v827 = vld [vmem:[%s6 + $0x48] sm:$0xf]
        %v828 = vld [vmem:[%s6 + $0x4c] sm:$0xf]
        %v829 = vld [vmem:[%s6 + $0x50] sm:$0xf]
        %v830 = vld [vmem:[%s6 + $0x54] sm:$0xf]
        %v831 = vld [vmem:[%s6 + $0x58] sm:$0xf]
        %v832 = vld [vmem:[%s6 + $0x5c] sm:$0xf]
        %v833 = vld [vmem:[%s6 + $0x60] sm:$0xf]
        %v834 = vld [vmem:[%s6 + $0x64] sm:$0xf]
        %v835 = vld [vmem:[%s6 + $0x68] sm:$0xf]
        %v836 = vld [vmem:[%s6 + $0x6c] sm:$0xf]
        %v837 = vld [vmem:[%s6 + $0x70] sm:$0xf]
        %v838 = vld [vmem:[%s6 + $0x74] sm:$0xf]
        %v839 = vld [vmem:[%s6 + $0x78] sm:$0xf]
        %v840 = vld [vmem:[%s6 + $0x7c] sm:$0xf]
        %v841 = vld [vmem:[%s7] sm:$0x1]
        %v843 = vlaneseq
        %v844 = vshrl.u32 %v843, 7
        %v845 = vsub.s32 0, %v844
        %v846 = vrot.slane %v841, %v845
        %v849 = vunpack.c.l.b16 %v808
        %v850 = vunpack.c.h.b16 %v808
        %v851 = vpack.c.b16 %v849, %v849
        %v852 = vpack.c.b16 %v850, %v850
        %v887 = vunpack.c.l.b16 %v809
        %v888 = vunpack.c.l.b16 %v810
        %v889 = vunpack.c.l.b16 %v811
        %v890 = vunpack.c.l.b16 %v812
        %v891 = vunpack.c.l.b16 %v813
        %v892 = vunpack.c.l.b16 %v814
        %v893 = vunpack.c.l.b16 %v815
        %v894 = vunpack.c.l.b16 %v816
        %v895 = vunpack.c.l.b16 %v817
        %v896 = vunpack.c.l.b16 %v818
        %v897 = vunpack.c.l.b16 %v819
        %v898 = vunpack.c.l.b16 %v820
        %v899 = vunpack.c.l.b16 %v821
        %v900 = vunpack.c.l.b16 %v822
        %v901 = vunpack.c.l.b16 %v823
        %v902 = vunpack.c.l.b16 %v824
        %v903 = vunpack.c.l.b16 %v825
        %v904 = vunpack.c.l.b16 %v826
        %v905 = vunpack.c.l.b16 %v827
        %v906 = vunpack.c.l.b16 %v828
        %v907 = vunpack.c.l.b16 %v829
        %v908 = vunpack.c.l.b16 %v830
        %v909 = vunpack.c.l.b16 %v831
        %v910 = vunpack.c.l.b16 %v832
        %v911 = vunpack.c.l.b16 %v833
        %v912 = vunpack.c.l.b16 %v834
        %v913 = vunpack.c.l.b16 %v835
        %v914 = vunpack.c.l.b16 %v836
        %v915 = vunpack.c.l.b16 %v837
        %v916 = vunpack.c.l.b16 %v838
        %v917 = vunpack.c.l.b16 %v839
        %v918 = vunpack.c.l.b16 %v840
        %v919 = vpack.c.b16 %v888, %v887
        %v920 = vpack.c.b16 %v890, %v889
        %v921 = vpack.c.b16 %v892, %v891
        %v922 = vpack.c.b16 %v894, %v893
        %v923 = vpack.c.b16 %v896, %v895
        %v924 = vpack.c.b16 %v898, %v897
        %v925 = vpack.c.b16 %v900, %v899
        %v926 = vpack.c.b16 %v902, %v901
        %v927 = vpack.c.b16 %v904, %v903
        %v928 = vpack.c.b16 %v906, %v905
        %v929 = vpack.c.b16 %v908, %v907
        %v930 = vpack.c.b16 %v910, %v909
        %v931 = vpack.c.b16 %v912, %v911
        %v932 = vpack.c.b16 %v914, %v913
        %v933 = vpack.c.b16 %v916, %v915
        %v934 = vpack.c.b16 %v918, %v917
        %951 = vmatprep.subr.bf16.mxu0 0
        %952 = vmatpush1.bf16.msra.mxu0 %v919
        %953 = vmatprep.subr.bf16.mxu0 0
        %954 = vmatpush1.bf16.msra.mxu0 %v920
        %955 = vmatprep.subr.bf16.mxu0 0
        %956 = vmatpush1.bf16.msra.mxu0 %v921
        %957 = vmatprep.subr.bf16.mxu0 0
        %958 = vmatpush1.bf16.msra.mxu0 %v922
        %959 = vmatprep.subr.bf16.mxu0 0
        %960 = vmatpush1.bf16.msra.mxu0 %v923
        %961 = vmatprep.subr.bf16.mxu0 0
        %962 = vmatpush1.bf16.msra.mxu0 %v924
        %963 = vmatprep.subr.bf16.mxu0 0
        %964 = vmatpush1.bf16.msra.mxu0 %v925
        %965 = vmatprep.subr.bf16.mxu0 0
        %966 = vmatpush1.bf16.msra.mxu0 %v926
        %967 = vmatprep.subr.bf16.mxu0 0
        %968 = vmatpush1.bf16.msra.mxu0 %v927
        %969 = vmatprep.subr.bf16.mxu0 0
        %970 = vmatpush1.bf16.msra.mxu0 %v928
        %971 = vmatprep.subr.bf16.mxu0 0
        %972 = vmatpush1.bf16.msra.mxu0 %v929
        %973 = vmatprep.subr.bf16.mxu0 0
        %974 = vmatpush1.bf16.msra.mxu0 %v930
        %975 = vmatprep.subr.bf16.mxu0 0
        %976 = vmatpush1.bf16.msra.mxu0 %v931
        %977 = vmatprep.subr.bf16.mxu0 0
        %978 = vmatpush1.bf16.msra.mxu0 %v932
        %979 = vmatprep.subr.bf16.mxu0 0
        %980 = vmatpush1.bf16.msra.mxu0 %v933
        %981 = vmatprep.subr.bf16.mxu0 0
        %982 = vmatpush1.bf16.msra.mxu0 %v934
        %983 = vmatprep.mubr.bf16.mxu0 %v852
        %984 = vmatmul.mubr.bf16.gmra.mrb[0].mxu0 %v851
        %v985 = vpop.f32.mrb[0].mxu0
        %v986 = vadd.f32 %v846, %v985
        %v987 = vpop.f32.mrb[0].mxu0
        %v988 = vpop.f32.mrb[0].mxu0
        %v989 = vpop.f32.mrb[0].mxu0
        %990 = vdwg.mxu0
        %v991 = vlaneseq
        %v992 = vshrl.u32 %v991, 7
        %vm993 = vcmask 1043456
        %v994 = vsel %vm993, %v986, 0.0
        %v995 = vrot.slane %v994, 4
        %v996 = vadd.f32 %v994, %v995
        %v997 = vrot.slane %v996, 2
        %v998 = vadd.f32 %v996, %v997
        %v999 = vrot.slane %v998, 1
        %v1000 = vadd.f32 %v998, %v999
        %vm1001 = vcmp.eq.s32.totalorder %v992, 0
        %v1002 = vsel %vm1001, %v1000, 0.0
        %v1003 = vadd.f32 %v1002, 0.0
        %v1005 = vrot.slane %v986, 4
        %v1007 = vsel %vm993, %v1005, 0.0
        %v1008 = vrot.slane %v1007, 4
        %v1009 = vadd.f32 %v1007, %v1008
        %v1010 = vrot.slane %v1009, 2
        %v1011 = vadd.f32 %v1009, %v1010
        %v1012 = vrot.slane %v1011, 1
        %v1013 = vadd.f32 %v1011, %v1012
        %vm1014 = vcmp.eq.s32.totalorder %v992, 1
        %v1015 = vsel %vm1014, %v1013, 0.0
        %v1016 = vadd.f32 %v1003, %v1015
        %v1017 = vld [vmem:[%s8] sm:$0x1]
        %v1019 = vlaneseq
        %v1020 = vshrl.u32 %v1019, 7
        %v1021 = vsub.s32 0, %v1020
        %v1022 = vrot.slane %v1017, %v1021
        %v1024 = vadd.f32 %v1022, %v1016
        %v1025 = vmul.f32 %v1024, 0.2
        %v1026 = vadd.f32 %v1022, %v1025
        %v1027 = vpack.c.bf16 %v1026, %v1026
        %v1028 = vld [vmem:[%s9] sm:$0xf]
        %v1029 = vld [vmem:[%s9 + $0x4] sm:$0xf]
        %v1030 = vld [vmem:[%s9 + $0x8] sm:$0xf]
        %v1031 = vld [vmem:[%s9 + $0xc] sm:$0xf]
        %v1032 = vld [vmem:[%s9 + $0x10] sm:$0xf]
        %v1033 = vld [vmem:[%s9 + $0x14] sm:$0xf]
        %v1034 = vld [vmem:[%s9 + $0x18] sm:$0xf]
        %v1035 = vld [vmem:[%s9 + $0x1c] sm:$0xf]
        %v1036 = vld [vmem:[%s9 + $0x20] sm:$0xf]
        %v1037 = vld [vmem:[%s9 + $0x24] sm:$0xf]
        %v1038 = vld [vmem:[%s9 + $0x28] sm:$0xf]
        %v1039 = vld [vmem:[%s9 + $0x2c] sm:$0xf]
        %v1040 = vld [vmem:[%s9 + $0x30] sm:$0xf]
        %v1041 = vld [vmem:[%s9 + $0x34] sm:$0xf]
        %v1042 = vld [vmem:[%s9 + $0x38] sm:$0xf]
        %v1043 = vld [vmem:[%s9 + $0x3c] sm:$0xf]
        %v1044 = vld [vmem:[%s10] sm:$0x1]
        %v1046 = vlaneseq
        %v1047 = vshrl.u32 %v1046, 7
        %v1048 = vsub.s32 0, %v1047
        %v1049 = vrot.slane %v1044, %v1048
        %v1067 = vunpack.c.l.b16 %v1028
        %v1068 = vunpack.c.l.b16 %v1029
        %v1069 = vunpack.c.l.b16 %v1030
        %v1070 = vunpack.c.l.b16 %v1031
        %v1071 = vunpack.c.l.b16 %v1032
        %v1072 = vunpack.c.l.b16 %v1033
        %v1073 = vunpack.c.l.b16 %v1034
        %v1074 = vunpack.c.l.b16 %v1035
        %v1075 = vunpack.c.l.b16 %v1036
        %v1076 = vunpack.c.l.b16 %v1037
        %v1077 = vunpack.c.l.b16 %v1038
        %v1078 = vunpack.c.l.b16 %v1039
        %v1079 = vunpack.c.l.b16 %v1040
        %v1080 = vunpack.c.l.b16 %v1041
        %v1081 = vunpack.c.l.b16 %v1042
        %v1082 = vunpack.c.l.b16 %v1043
        %v1083 = vpack.c.b16 %v1068, %v1067
        %v1084 = vpack.c.b16 %v1070, %v1069
        %v1085 = vpack.c.b16 %v1072, %v1071
        %v1086 = vpack.c.b16 %v1074, %v1073
        %v1087 = vpack.c.b16 %v1076, %v1075
        %v1088 = vpack.c.b16 %v1078, %v1077
        %v1089 = vpack.c.b16 %v1080, %v1079
        %v1090 = vpack.c.b16 %v1082, %v1081
        %1099 = vmatprep.subr.bf16.mxu0 0
        %1100 = vmatpush1.bf16.msra.mxu0 %v1083
        %1101 = vmatprep.subr.bf16.mxu0 0
        %1102 = vmatpush1.bf16.msra.mxu0 %v1084
        %1103 = vmatprep.subr.bf16.mxu0 0
        %1104 = vmatpush1.bf16.msra.mxu0 %v1085
        %1105 = vmatprep.subr.bf16.mxu0 0
        %1106 = vmatpush1.bf16.msra.mxu0 %v1086
        %1107 = vmatprep.subr.bf16.mxu0 0
        %1108 = vmatpush1.bf16.msra.mxu0 %v1087
        %1109 = vmatprep.subr.bf16.mxu0 0
        %1110 = vmatpush1.bf16.msra.mxu0 %v1088
        %1111 = vmatprep.subr.bf16.mxu0 0
        %1112 = vmatpush1.bf16.msra.mxu0 %v1089
        %1113 = vmatprep.subr.bf16.mxu0 0
        %1114 = vmatpush1.bf16.msra.mxu0 %v1090
        %1115 = vmatprep.subr.bf16.mxu0 0
        %1116 = vmatpush1.bf16.msra.mxu0 0
        %1117 = vmatprep.subr.bf16.mxu0 0
        %1118 = vmatpush1.bf16.msra.mxu0 0
        %1119 = vmatprep.subr.bf16.mxu0 0
        %1120 = vmatpush1.bf16.msra.mxu0 0
        %1121 = vmatprep.subr.bf16.mxu0 0
        %1122 = vmatpush1.bf16.msra.mxu0 0
        %1123 = vmatprep.subr.bf16.mxu0 0
        %1124 = vmatpush1.bf16.msra.mxu0 0
        %1125 = vmatprep.subr.bf16.mxu0 0
        %1126 = vmatpush1.bf16.msra.mxu0 0
        %1127 = vmatprep.subr.bf16.mxu0 0
        %1128 = vmatpush1.bf16.msra.mxu0 0
        %1129 = vmatprep.subr.bf16.mxu0 0
        %1130 = vmatpush1.bf16.msra.mxu0 0
        %1131 = vmatprep.mubr.bf16.mxu0 0
        %1132 = vmatmul.mubr.bf16.gmra.mrb[0].mxu0 %v1027
        %v1133 = vpop.f32.mrb[0].mxu0
        %v1134 = vadd.f32 %v1049, %v1133
        %v1135 = vpop.f32.mrb[0].mxu0
        %v1136 = vpop.f32.mrb[0].mxu0
        %v1137 = vpop.f32.mrb[0].mxu0
        %1138 = vdwg.mxu0
        %v1139 = vtanh.pop %v1134
        %v1140 = vpack.c.bf16 %v1139, %v1139
        %v1141 = vld [vmem:[%s11] sm:$0xf]
        %v1142 = vld [vmem:[%s11 + $0x4] sm:$0xf]
        %v1143 = vld [vmem:[%s11 + $0x8] sm:$0xf]
        %v1144 = vld [vmem:[%s11 + $0xc] sm:$0xf]
        %v1145 = vld [vmem:[%s11 + $0x10] sm:$0xf]
        %v1146 = vld [vmem:[%s11 + $0x14] sm:$0xf]
        %v1147 = vld [vmem:[%s11 + $0x18] sm:$0xf]
        %v1148 = vld [vmem:[%s11 + $0x1c] sm:$0xf]
        %v1149 = vld [vmem:[%s11 + $0x20] sm:$0xf]
        %v1150 = vld [vmem:[%s11 + $0x24] sm:$0xf]
        %v1151 = vld [vmem:[%s11 + $0x28] sm:$0xf]
        %v1152 = vld [vmem:[%s11 + $0x2c] sm:$0xf]
        %v1153 = vld [vmem:[%s11 + $0x30] sm:$0xf]
        %v1154 = vld [vmem:[%s11 + $0x34] sm:$0xf]
        %v1155 = vld [vmem:[%s11 + $0x38] sm:$0xf]
        %v1156 = vld [vmem:[%s11 + $0x3c] sm:$0xf]
        %v1157 = vld [vmem:[%s12] sm:$0x1]
        %v1159 = vlaneseq
        %v1160 = vshrl.u32 %v1159, 7
        %v1161 = vsub.s32 0, %v1160
        %v1162 = vrot.slane %v1157, %v1161
        %v1180 = vunpack.c.l.b16 %v1141
        %v1181 = vunpack.c.l.b16 %v1142
        %v1182 = vunpack.c.l.b16 %v1143
        %v1183 = vunpack.c.l.b16 %v1144
        %v1184 = vunpack.c.l.b16 %v1145
        %v1185 = vunpack.c.l.b16 %v1146
        %v1186 = vunpack.c.l.b16 %v1147
        %v1187 = vunpack.c.l.b16 %v1148
        %v1188 = vunpack.c.l.b16 %v1149
        %v1189 = vunpack.c.l.b16 %v1150
        %v1190 = vunpack.c.l.b16 %v1151
        %v1191 = vunpack.c.l.b16 %v1152
        %v1192 = vunpack.c.l.b16 %v1153
        %v1193 = vunpack.c.l.b16 %v1154
        %v1194 = vunpack.c.l.b16 %v1155
        %v1195 = vunpack.c.l.b16 %v1156
        %v1196 = vpack.c.b16 %v1181, %v1180
        %v1197 = vpack.c.b16 %v1183, %v1182
        %v1198 = vpack.c.b16 %v1185, %v1184
        %v1199 = vpack.c.b16 %v1187, %v1186
        %v1200 = vpack.c.b16 %v1189, %v1188
        %v1201 = vpack.c.b16 %v1191, %v1190
        %v1202 = vpack.c.b16 %v1193, %v1192
        %v1203 = vpack.c.b16 %v1195, %v1194
        %1212 = vmatprep.subr.bf16.mxu0 0
        %1213 = vmatpush1.bf16.msra.mxu0 %v1196
        %1214 = vmatprep.subr.bf16.mxu0 0
        %1215 = vmatpush1.bf16.msra.mxu0 %v1197
        %1216 = vmatprep.subr.bf16.mxu0 0
        %1217 = vmatpush1.bf16.msra.mxu0 %v1198
        %1218 = vmatprep.subr.bf16.mxu0 0
        %1219 = vmatpush1.bf16.msra.mxu0 %v1199
        %1220 = vmatprep.subr.bf16.mxu0 0
        %1221 = vmatpush1.bf16.msra.mxu0 %v1200
        %1222 = vmatprep.subr.bf16.mxu0 0
        %1223 = vmatpush1.bf16.msra.mxu0 %v1201
        %1224 = vmatprep.subr.bf16.mxu0 0
        %1225 = vmatpush1.bf16.msra.mxu0 %v1202
        %1226 = vmatprep.subr.bf16.mxu0 0
        %1227 = vmatpush1.bf16.msra.mxu0 %v1203
        %1228 = vmatprep.subr.bf16.mxu0 0
        %1229 = vmatpush1.bf16.msra.mxu0 0
        %1230 = vmatprep.subr.bf16.mxu0 0
        %1231 = vmatpush1.bf16.msra.mxu0 0
        %1232 = vmatprep.subr.bf16.mxu0 0
        %1233 = vmatpush1.bf16.msra.mxu0 0
        %1234 = vmatprep.subr.bf16.mxu0 0
        %1235 = vmatpush1.bf16.msra.mxu0 0
        %1236 = vmatprep.subr.bf16.mxu0 0
        %1237 = vmatpush1.bf16.msra.mxu0 0
        %1238 = vmatprep.subr.bf16.mxu0 0
        %1239 = vmatpush1.bf16.msra.mxu0 0
        %1240 = vmatprep.subr.bf16.mxu0 0
        %1241 = vmatpush1.bf16.msra.mxu0 0
        %1242 = vmatprep.subr.bf16.mxu0 0
        %1243 = vmatpush1.bf16.msra.mxu0 0
        %1244 = vmatprep.mubr.bf16.mxu0 0
        %1245 = vmatmul.mubr.bf16.gmra.mrb[0].mxu0 %v1140
        %v1246 = vpop.f32.mrb[0].mxu0
        %v1247 = vadd.f32 %v1162, %v1246
        %v1248 = vpop.f32.mrb[0].mxu0
        %v1249 = vpop.f32.mrb[0].mxu0
        %v1250 = vpop.f32.mrb[0].mxu0
        %1251 = vdwg.mxu0
        %v1252 = vtanh.pop %v1247
        %v1253 = vmul.f32 %v1252, %v1252
        %1254 = vadd.xlane.f32.xlu0 %v1253
        %v1255 = vpop.xlane.xlu0 %1254
        %v1256 = vmax.f32 %v1255, 1e-24
        %v1257 = vrsqrt.pop %v1256
        %v1258 = vmul.f32 %v1252, %v1257
        %1259 = vst [vmem:[%s418] sm:$0xff] %v1258
      $region80: #{tfood_forward.1} parent=71 // pred_fallthru
        _
      %p1260 = scmp.lt.s32.totalorder %s24, 1
      %s1261 = scalar_select %p1260, %s24, 1
      %s1262 = smul.addr %s1261, 8
      %s1263 = scalar_lea.vmem %s13, %s1262
      // Predicated region
      $region81: #{tfood_forward.1} parent=71 // pred_check
        %p1264 = pneg %p315
      $region82: #{tfood_forward.1} parent=71 // pred_check_branch
        %1266 = sbr.rel (%p1264) target = $region84
      $region83: #{tfood_forward.1} parent=71 // pred_region
        _
      $region84: #{tfood_forward.1} parent=71 // pred_fallthru
        _
    $region72: #{tfood_forward.1} parent=5 // pred_fallthru
      _
    %p1267 = scmp.le.s32.totalorder 2, %s19
    // Predicated region
    $region85: #{tfood_forward.1} parent=5 // pred_check
      %p1268 = pneg %p1267
    $region86: #{tfood_forward.1} parent=5 // pred_check_branch
      %1270 = sbr.rel (%p1268) target = $region88
    $region87: #{tfood_forward.1} parent=5 // pred_region
      %s1271 = ssub.s32 %s19, 2
      // Predicated region
      $region89: #{tfood_forward.1} parent=87 // pred_check
        %p1272 = pneg %p321
      $region90: #{tfood_forward.1} parent=87 // pred_check_branch
        %1274 = sbr.rel (%p1272) target = $region92
      $region91: #{tfood_forward.1} parent=87 // pred_region
        %p1275 = scmp.lt.s32.totalorder %s25, 1
        %s1276 = scalar_select %p1275, %s25, 1
        %s1277 = smul.addr %s1276, 8
        %s1278 = scalar_lea.vmem %s13, %s1277
      $region92: #{tfood_forward.1} parent=87 // pred_fallthru
        _
    $region88: #{tfood_forward.1} parent=5 // pred_fallthru
      _
  $region6: #{tfood_forward.1} parent=0 // loop_footer
    %s23 = sadd.s32 1, %s19
  $region7: #{tfood_forward.1} parent=0 // loop_footer_branch
    %18 = sbr.rel target = $region3
  $region8: #{tfood_forward.1} parent=0 // loop_exit
    _

</llo_original>
